<compile_context>
chip_gen: v7x
topology: tpu7x:2x2x1
jax: 0.10.0
libtpu: 0.0.40
codegen_flags: <defaults>
</compile_context>

<pallas_src>
import functools

import jax
import jax.numpy as jnp
from jax.experimental import pallas as pl
from jax.experimental.pallas import tpu as pltpu

LANE = 128


def _round_up(v, m):
    return (v + m - 1) // m * m


# ----------------------------- fused Pallas kernel ---------------------------
def _gin_fused_kernel(adj_ref, x_ref, *refs, num_layer):
    """All GIN layers in one kernel invocation (single VMEM-resident block).

    adj_ref : [Np, Np]  bf16  (A + I), zero rows/cols for padded nodes
    x_ref   : [Np, Dp]  bf16  zero rows/cols for padding
    refs    : per layer l: w1 [Dp_l, Hp] bf16, b1 [1, Hp] f32,
                           w2 [Hp, Hp]   bf16, b2 [1, Hp] f32,
              followed by out_ref [Np, Hp] f32.
    Padded rows/cols never leak into real rows: padded adjacency columns are
    zero, and the final padded rows/cols are sliced off outside the kernel.
    """
    out_ref = refs[-1]
    adj = adj_ref[...]
    h_bf16 = x_ref[...]
    h_f32 = None
    for l in range(num_layer):
        w1 = refs[4 * l + 0][...]
        b1 = refs[4 * l + 1][...]
        w2 = refs[4 * l + 2][...]
        b2 = refs[4 * l + 3][...]
        din = h_bf16.shape[1]       # post-padding width of current activation
        hout = w1.shape[1]          # post-padding width after w1
        if hout < din:
            # project-then-aggregate: (A+I) @ (h @ w1) -- narrower N^2 matmul
            t = jnp.dot(h_bf16, w1, preferred_element_type=jnp.float32)
            z = jnp.dot(adj, t.astype(jnp.bfloat16),
                        preferred_element_type=jnp.float32) + b1
        else:
            # aggregate-then-project: ((A+I) @ h) @ w1  (reference ordering)
            agg = jnp.dot(adj, h_bf16, preferred_element_type=jnp.float32)
            z = jnp.dot(agg.astype(jnp.bfloat16), w1,
                        preferred_element_type=jnp.float32) + b1
        z = jnp.maximum(z, 0.0)                            # ReLU inside GIN MLP
        h_f32 = jnp.dot(z.astype(jnp.bfloat16), w2,
                        preferred_element_type=jnp.float32) + b2
        if l != num_layer - 1:                             # act() between layers
            h_f32 = jnp.maximum(h_f32, 0.0)
        # TODO(synk): dropout skipped (drop_ratio=0 -> identity in the reference).
        h_bf16 = h_f32.astype(jnp.bfloat16)
    out_ref[...] = h_f32.astype(out_ref.dtype)


def gin_forward_fused(adj_pad, x_pad, padded_params):
    """Single fused pallas_call over all layers; returns padded [Np, Hp] f32."""
    n_pad = x_pad.shape[0]
    num_layer = len(padded_params)
    h_pad = padded_params[-1][2].shape[1]
    flat = [t for layer in padded_params for t in layer]
    args = [adj_pad, x_pad] + flat

    # advisory cost estimate (aggregation + MLP matmuls, padded sizes)
    flops = 0
    din = x_pad.shape[1]
    for (w1, _, _, _) in padded_params:
        h = w1.shape[1]
        flops += (2 * n_pad * n_pad * min(din, h)
                  + 2 * n_pad * din * h + 2 * n_pad * h * h)
        din = h
    bytes_accessed = (sum(int(a.size) * a.dtype.itemsize for a in args)
                      + n_pad * h_pad * 4)

    kernel = functools.partial(_gin_fused_kernel, num_layer=num_layer)
    vmem = pl.BlockSpec(memory_space=pltpu.MemorySpace.VMEM)

    # TODO(synk): for large graphs, replace the dense (A+I) aggregation with a
    # scalar-prefetch CSR/segment-sum gather and a dst-tiled grid
    # (dimension_semantics=("parallel","arbitrary"), f32 VMEM accumulator),
    # with tile sizes re-derived per generation (64 MiB VMEM on v7x vs 128 MiB
    # on v5e/v6e); at Np=128 a single resident block is optimal.
    return pl.pallas_call(
        kernel,
        out_shape=jax.ShapeDtypeStruct((n_pad, h_pad), jnp.float32),
        in_specs=[vmem for _ in args],
        out_specs=vmem,
        cost_estimate=pl.CostEstimate(flops=int(flops), transcendentals=0,
                                      bytes_accessed=int(bytes_accessed)),
    )(*args)


# ----------------------------- host-side preparation --------------------------
def build_adj_plus_i_padded(edge_index, n, n_pad):
    """Dense (A + I) zero-padded to [n_pad, n_pad]; identity only on real nodes.
    Integer edge counts are exact in bf16 (multiplicity < 256)."""
    src, dst = edge_index[0], edge_index[1]
    adj = jnp.zeros((n_pad, n_pad), jnp.float32).at[dst, src].add(1.0)
    diag = jnp.arange(n)
    adj = adj.at[diag, diag].add(1.0)
    return adj.astype(jnp.bfloat16)


def pad_x(x, n_pad, d_pad):
    """Zero-pad node features to a lane/sublane-dense [n_pad, d_pad] bf16 block."""
    n, d = x.shape
    xp = jnp.zeros((n_pad, d_pad), jnp.float32).at[:n, :d].set(x)
    return xp.astype(jnp.bfloat16)


def pad_params(params, din_pad, lane=LANE):
    """Zero-pad weight dims to lane-dense multiples of 128; weights -> bf16."""
    padded = []
    d = din_pad                           # padded input width of the layer
    for (w1, b1, w2, b2) in params:
        din, h = w1.shape
        hp = _round_up(h, lane)
        w1p = jnp.zeros((d, hp), jnp.float32).at[:din, :h].set(w1).astype(jnp.bfloat16)
        b1p = jnp.zeros((1, hp), jnp.float32).at[:, :h].set(b1)
        w2p = jnp.zeros((hp, hp), jnp.float32).at[:h, :h].set(w2).astype(jnp.bfloat16)
        b2p = jnp.zeros((1, hp), jnp.float32).at[:, :h].set(b2)
        padded.append((w1p, b1p, w2p, b2p))
        d = hp
    return padded


def init_gin_params(key, input_dim, hid_dim, out_dim, num_layer=3):
    """Deterministic init matching the torch module's layer shapes
    (Linear(i,h), Linear(h,h)) per GINConv, uniform +-1/sqrt(fan_in)."""
    dims = ([(input_dim, hid_dim)] + [(hid_dim, hid_dim)] * (num_layer - 2)
            + [(hid_dim, out_dim)])
    params = []
    for (din, dout) in dims:
        key, k1, k2, k3, k4 = jax.random.split(key, 5)
        s1 = 1.0 / jnp.sqrt(din)
        s2 = 1.0 / jnp.sqrt(dout)
        w1 = jax.random.uniform(k1, (din, dout), jnp.float32, -s1, s1)
        b1 = jax.random.uniform(k2, (1, dout), jnp.float32, -s1, s1)
        w2 = jax.random.uniform(k3, (dout, dout), jnp.float32, -s2, s2)
        b2 = jax.random.uniform(k4, (1, dout), jnp.float32, -s2, s2)
        params.append((w1, b1, w2, b2))
    return params


def gin_forward_ref(x, edge_index, params):
    """Pure-JAX f32 reference (module semantics) for correctness checking."""
    n = x.shape[0]
    src, dst = edge_index[0], edge_index[1]
    adj = jnp.zeros((n, n), jnp.float32).at[dst, src].add(1.0)
    adj_plus_i = adj + jnp.eye(n, dtype=jnp.float32)
    h = x
    for idx, (w1, b1, w2, b2) in enumerate(params):
        agg = adj_plus_i @ h
        t = jnp.maximum(agg @ w1 + b1, 0.0)
        h = t @ w2 + b2
        if idx != len(params) - 1:
            h = jnp.maximum(h, 0.0)
    return h


# --------------------------------- main ---------------------------------------
if __name__ == "__main__":
    key = jax.random.PRNGKey(0)

    # Small synthetic graph: N nodes, input_dim features.
    N = 16
    input_dim = 32
    hid_dim = int(0.618 * input_dim)   # matches the module's default: 19
    out_dim = hid_dim
    num_layer = 3

    kx, ke, kp = jax.random.split(key, 3)
    x = jax.random.normal(kx, (N, input_dim), jnp.float32)

    # Deterministic edge list: a ring plus some random edges (src, dst).
    ring_src = jnp.arange(N, dtype=jnp.int32)
    ring_dst = (ring_src + 1) % N
    rand_src = jax.random.randint(ke, (12,), 0, N, dtype=jnp.int32)
    rand_dst = jax.random.randint(jax.random.fold_in(ke, 1), (12,), 0, N,
                                  dtype=jnp.int32)
    edge_index = jnp.stack([jnp.concatenate([ring_src, rand_src]),
                            jnp.concatenate([ring_dst, rand_dst])], axis=0)

    params = init_gin_params(kp, input_dim, hid_dim, out_dim, num_layer)

    # Hoisted one-time preprocessing (reused across forward calls): pad N, Din,
    # H to 128 so every kernel operand is a lane-dense bf16 tile.
    n_pad = _round_up(N, LANE)
    d_pad = _round_up(input_dim, LANE)
    adj_pad = build_adj_plus_i_padded(edge_index, N, n_pad)
    x_pad = pad_x(x, n_pad, d_pad)
    padded = pad_params(params, d_pad)

    fwd = jax.jit(gin_forward_fused)
    out_pad = jax.block_until_ready(fwd(adj_pad, x_pad, padded))
    node_emb = out_pad[:N, :out_dim]   # strip padding outside the jitted call

    ref = jax.block_until_ready(gin_forward_ref(x, edge_index, params))
    assert node_emb.shape == (N, out_dim), node_emb.shape
    # bf16 matmul inputs (f32 accumulation): check scale-relative error.
    rel_err = float(jnp.max(jnp.abs(node_emb - ref)) /
                    (jnp.max(jnp.abs(ref)) + 1e-6))
    assert rel_err < 5e-2, rel_err

    print("KERNEL_OK")
</pallas_src>

<mosaic_0001>
module attributes {stable_mosaic.version = 11 : i64} {
  func.func @_gin_fused_kernel(%arg0: memref<128x128xbf16, #tpu.memory_space<vmem>>, %arg1: memref<128x128xbf16, #tpu.memory_space<vmem>>, %arg2: memref<128x128xbf16, #tpu.memory_space<vmem>>, %arg3: memref<1x128xf32, #tpu.memory_space<vmem>>, %arg4: memref<128x128xbf16, #tpu.memory_space<vmem>>, %arg5: memref<1x128xf32, #tpu.memory_space<vmem>>, %arg6: memref<128x128xbf16, #tpu.memory_space<vmem>>, %arg7: memref<1x128xf32, #tpu.memory_space<vmem>>, %arg8: memref<128x128xbf16, #tpu.memory_space<vmem>>, %arg9: memref<1x128xf32, #tpu.memory_space<vmem>>, %arg10: memref<128x128xbf16, #tpu.memory_space<vmem>>, %arg11: memref<1x128xf32, #tpu.memory_space<vmem>>, %arg12: memref<128x128xbf16, #tpu.memory_space<vmem>>, %arg13: memref<1x128xf32, #tpu.memory_space<vmem>>, %arg14: memref<128x128xf32, #tpu.memory_space<vmem>>) attributes {dimension_semantics = [], scalar_prefetch = 0 : i64, scratch_operands = 0 : i64, tpu.core_type = #tpu.core_type<tc>} {
    %c0 = arith.constant 0 : index
    %c0_0 = arith.constant 0 : index
    %0 = vector.load %arg0[%c0, %c0_0] : memref<128x128xbf16, #tpu.memory_space<vmem>>, vector<128x128xbf16>
    %c0_1 = arith.constant 0 : index
    %c0_2 = arith.constant 0 : index
    %1 = vector.load %arg1[%c0_1, %c0_2] : memref<128x128xbf16, #tpu.memory_space<vmem>>, vector<128x128xbf16>
    %c0_3 = arith.constant 0 : index
    %c0_4 = arith.constant 0 : index
    %2 = vector.load %arg2[%c0_3, %c0_4] : memref<128x128xbf16, #tpu.memory_space<vmem>>, vector<128x128xbf16>
    %c0_5 = arith.constant 0 : index
    %c0_6 = arith.constant 0 : index
    %3 = vector.load %arg3[%c0_5, %c0_6] : memref<1x128xf32, #tpu.memory_space<vmem>>, vector<1x128xf32>
    %c0_7 = arith.constant 0 : index
    %c0_8 = arith.constant 0 : index
    %4 = vector.load %arg4[%c0_7, %c0_8] : memref<128x128xbf16, #tpu.memory_space<vmem>>, vector<128x128xbf16>
    %c0_9 = arith.constant 0 : index
    %c0_10 = arith.constant 0 : index
    %5 = vector.load %arg5[%c0_9, %c0_10] : memref<1x128xf32, #tpu.memory_space<vmem>>, vector<1x128xf32>
    %cst = arith.constant dense<0.000000e+00> : vector<128x128xf32>
    %6 = tpu.matmul %0, %1, %cst {dimension_numbers = #tpu.dot_dimension_numbers<[1], [0], [0], [1], [0, 0, 1, 1], [], []>} : vector<128x128xbf16>, vector<128x128xbf16>, vector<128x128xf32> -> vector<128x128xf32>
    %7 = arith.truncf %6 : vector<128x128xf32> to vector<128x128xbf16>
    %cst_11 = arith.constant dense<0.000000e+00> : vector<128x128xf32>
    %8 = tpu.matmul %7, %2, %cst_11 {dimension_numbers = #tpu.dot_dimension_numbers<[1], [0], [0], [1], [0, 0, 1, 1], [], []>} : vector<128x128xbf16>, vector<128x128xbf16>, vector<128x128xf32> -> vector<128x128xf32>
    %9 = vector.broadcast %3 : vector<1x128xf32> to vector<128x128xf32>
    %10 = arith.addf %8, %9 : vector<128x128xf32>
    %cst_12 = arith.constant 0.000000e+00 : f32
    %11 = vector.broadcast %cst_12 : f32 to vector<128x128xf32>
    %12 = arith.maximumf %10, %11 : vector<128x128xf32>
    %13 = arith.truncf %12 : vector<128x128xf32> to vector<128x128xbf16>
    %cst_13 = arith.constant dense<0.000000e+00> : vector<128x128xf32>
    %14 = tpu.matmul %13, %4, %cst_13 {dimension_numbers = #tpu.dot_dimension_numbers<[1], [0], [0], [1], [0, 0, 1, 1], [], []>} : vector<128x128xbf16>, vector<128x128xbf16>, vector<128x128xf32> -> vector<128x128xf32>
    %15 = vector.broadcast %5 : vector<1x128xf32> to vector<128x128xf32>
    %16 = arith.addf %14, %15 : vector<128x128xf32>
    %cst_14 = arith.constant 0.000000e+00 : f32
    %17 = vector.broadcast %cst_14 : f32 to vector<128x128xf32>
    %18 = arith.maximumf %16, %17 : vector<128x128xf32>
    %19 = arith.truncf %18 : vector<128x128xf32> to vector<128x128xbf16>
    %c0_15 = arith.constant 0 : index
    %c0_16 = arith.constant 0 : index
    %20 = vector.load %arg6[%c0_15, %c0_16] : memref<128x128xbf16, #tpu.memory_space<vmem>>, vector<128x128xbf16>
    %c0_17 = arith.constant 0 : index
    %c0_18 = arith.constant 0 : index
    %21 = vector.load %arg7[%c0_17, %c0_18] : memref<1x128xf32, #tpu.memory_space<vmem>>, vector<1x128xf32>
    %c0_19 = arith.constant 0 : index
    %c0_20 = arith.constant 0 : index
    %22 = vector.load %arg8[%c0_19, %c0_20] : memref<128x128xbf16, #tpu.memory_space<vmem>>, vector<128x128xbf16>
    %c0_21 = arith.constant 0 : index
    %c0_22 = arith.constant 0 : index
    %23 = vector.load %arg9[%c0_21, %c0_22] : memref<1x128xf32, #tpu.memory_space<vmem>>, vector<1x128xf32>
    %cst_23 = arith.constant dense<0.000000e+00> : vector<128x128xf32>
    %24 = tpu.matmul %0, %19, %cst_23 {dimension_numbers = #tpu.dot_dimension_numbers<[1], [0], [0], [1], [0, 0, 1, 1], [], []>} : vector<128x128xbf16>, vector<128x128xbf16>, vector<128x128xf32> -> vector<128x128xf32>
    %25 = arith.truncf %24 : vector<128x128xf32> to vector<128x128xbf16>
    %cst_24 = arith.constant dense<0.000000e+00> : vector<128x128xf32>
    %26 = tpu.matmul %25, %20, %cst_24 {dimension_numbers = #tpu.dot_dimension_numbers<[1], [0], [0], [1], [0, 0, 1, 1], [], []>} : vector<128x128xbf16>, vector<128x128xbf16>, vector<128x128xf32> -> vector<128x128xf32>
    %27 = vector.broadcast %21 : vector<1x128xf32> to vector<128x128xf32>
    %28 = arith.addf %26, %27 : vector<128x128xf32>
    %cst_25 = arith.constant 0.000000e+00 : f32
    %29 = vector.broadcast %cst_25 : f32 to vector<128x128xf32>
    %30 = arith.maximumf %28, %29 : vector<128x128xf32>
    %31 = arith.truncf %30 : vector<128x128xf32> to vector<128x128xbf16>
    %cst_26 = arith.constant dense<0.000000e+00> : vector<128x128xf32>
    %32 = tpu.matmul %31, %22, %cst_26 {dimension_numbers = #tpu.dot_dimension_numbers<[1], [0], [0], [1], [0, 0, 1, 1], [], []>} : vector<128x128xbf16>, vector<128x128xbf16>, vector<128x128xf32> -> vector<128x128xf32>
    %33 = vector.broadcast %23 : vector<1x128xf32> to vector<128x128xf32>
    %34 = arith.addf %32, %33 : vector<128x128xf32>
    %cst_27 = arith.constant 0.000000e+00 : f32
    %35 = vector.broadcast %cst_27 : f32 to vector<128x128xf32>
    %36 = arith.maximumf %34, %35 : vector<128x128xf32>
    %37 = arith.truncf %36 : vector<128x128xf32> to vector<128x128xbf16>
    %c0_28 = arith.constant 0 : index
    %c0_29 = arith.constant 0 : index
    %38 = vector.load %arg10[%c0_28, %c0_29] : memref<128x128xbf16, #tpu.memory_space<vmem>>, vector<128x128xbf16>
    %c0_30 = arith.constant 0 : index
    %c0_31 = arith.constant 0 : index
    %39 = vector.load %arg11[%c0_30, %c0_31] : memref<1x128xf32, #tpu.memory_space<vmem>>, vector<1x128xf32>
    %c0_32 = arith.constant 0 : index
    %c0_33 = arith.constant 0 : index
    %40 = vector.load %arg12[%c0_32, %c0_33] : memref<128x128xbf16, #tpu.memory_space<vmem>>, vector<128x128xbf16>
    %c0_34 = arith.constant 0 : index
    %c0_35 = arith.constant 0 : index
    %41 = vector.load %arg13[%c0_34, %c0_35] : memref<1x128xf32, #tpu.memory_space<vmem>>, vector<1x128xf32>
    %cst_36 = arith.constant dense<0.000000e+00> : vector<128x128xf32>
    %42 = tpu.matmul %0, %37, %cst_36 {dimension_numbers = #tpu.dot_dimension_numbers<[1], [0], [0], [1], [0, 0, 1, 1], [], []>} : vector<128x128xbf16>, vector<128x128xbf16>, vector<128x128xf32> -> vector<128x128xf32>
    %43 = arith.truncf %42 : vector<128x128xf32> to vector<128x128xbf16>
    %cst_37 = arith.constant dense<0.000000e+00> : vector<128x128xf32>
    %44 = tpu.matmul %43, %38, %cst_37 {dimension_numbers = #tpu.dot_dimension_numbers<[1], [0], [0], [1], [0, 0, 1, 1], [], []>} : vector<128x128xbf16>, vector<128x128xbf16>, vector<128x128xf32> -> vector<128x128xf32>
    %45 = vector.broadcast %39 : vector<1x128xf32> to vector<128x128xf32>
    %46 = arith.addf %44, %45 : vector<128x128xf32>
    %cst_38 = arith.constant 0.000000e+00 : f32
    %47 = vector.broadcast %cst_38 : f32 to vector<128x128xf32>
    %48 = arith.maximumf %46, %47 : vector<128x128xf32>
    %49 = arith.truncf %48 : vector<128x128xf32> to vector<128x128xbf16>
    %cst_39 = arith.constant dense<0.000000e+00> : vector<128x128xf32>
    %50 = tpu.matmul %49, %40, %cst_39 {dimension_numbers = #tpu.dot_dimension_numbers<[1], [0], [0], [1], [0, 0, 1, 1], [], []>} : vector<128x128xbf16>, vector<128x128xbf16>, vector<128x128xf32> -> vector<128x128xf32>
    %51 = vector.broadcast %41 : vector<1x128xf32> to vector<128x128xf32>
    %52 = arith.addf %50, %51 : vector<128x128xf32>
    %c0_40 = arith.constant 0 : index
    %c0_41 = arith.constant 0 : index
    %53 = vector.load %arg14[%c0_40, %c0_41] : memref<128x128xf32, #tpu.memory_space<vmem>>, vector<128x128xf32>
    tpu.vector_store %arg14[%c0_40, %c0_41], %52 {strides = array<i32>} : memref<128x128xf32, #tpu.memory_space<vmem>>, vector<128x128xf32>,
    return
  }
}

</mosaic_0001>

<llo_original>
// kernel: gin_forward_fused.1
$region0: #{gin_forward_fused.1}
  #allocation0 [shape = 'u32[]', space=smem, size = 0x4, offset = 0x4, fixed_abs, tag = 'smem constant byte address 0x4 - core index']
  #allocation1 [shape = 'u32[144,128]{1,0:T(1,128)}', space=vmem, size = 0x12000, scoped, tag = 'internal scratch']
  %s0 = inlined_call_operand.hbm [shape: bf16[128,128], index: 0, kind: input, shape index: {}]
  %s1 = inlined_call_operand.hbm [shape: bf16[128,128], index: 1, kind: input, shape index: {}]
  %s2 = inlined_call_operand.hbm [shape: bf16[128,128], index: 2, kind: input, shape index: {}]
  %s3 = inlined_call_operand.vmem [shape: f32[1,128], index: 3, kind: input, shape index: {}]
  %s4 = inlined_call_operand.hbm [shape: bf16[128,128], index: 4, kind: input, shape index: {}]
  %s5 = inlined_call_operand.vmem [shape: f32[1,128], index: 5, kind: input, shape index: {}]
  %s6 = inlined_call_operand.hbm [shape: bf16[128,128], index: 6, kind: input, shape index: {}]
  %s7 = inlined_call_operand.vmem [shape: f32[1,128], index: 7, kind: input, shape index: {}]
  %s8 = inlined_call_operand.hbm [shape: bf16[128,128], index: 8, kind: input, shape index: {}]
  %s9 = inlined_call_operand.vmem [shape: f32[1,128], index: 9, kind: input, shape index: {}]
  %s10 = inlined_call_operand.hbm [shape: bf16[128,128], index: 10, kind: input, shape index: {}]
  %s11 = inlined_call_operand.vmem [shape: f32[1,128], index: 11, kind: input, shape index: {}]
  %s12 = inlined_call_operand.hbm [shape: bf16[128,128], index: 12, kind: input, shape index: {}]
  %s13 = inlined_call_operand.vmem [shape: f32[1,128], index: 13, kind: input, shape index: {}]
  %s14 = inlined_call_operand.hbm [shape: f32[128,128], index: 14, kind: output, shape index: {}]
  %s15 = sld [smem:[#allocation0]]
  $region98: #{gin_forward_fused.1} parent=0
    _
  %s17 = ssub.s32 1, %s15
  %s18 = scalar_select 0, %s17, %s15
  $region1: #{gin_forward_fused.1} parent=0
    #allocation2 [shape = 'u8[32768]{0}', space=vmem, size = 0x8000, scoped, tag = 'input window, operand 0, single buffered']
    #allocation3 [shape = 's32[1]{0}', space=sflag, size = 0x4, scoped, tag = 'scoped memory for gin_forward_fused.1']
    #allocation4 [shape = 's32[1]{0}', space=sflag, size = 0x4, scoped, tag = 'scoped memory for gin_forward_fused.1']
    #allocation5 [shape = 'u8[32768]{0}', space=vmem, size = 0x8000, scoped, tag = 'input window, operand 1, single buffered']
    #allocation6 [shape = 's32[1]{0}', space=sflag, size = 0x4, scoped, tag = 'scoped memory for gin_forward_fused.1']
    #allocation7 [shape = 'u8[32768]{0}', space=vmem, size = 0x8000, scoped, tag = 'input window, operand 2, single buffered']
    #allocation8 [shape = 'u8[32768]{0}', space=vmem, size = 0x8000, scoped, tag = 'input window, operand 4, single buffered']
    #allocation9 [shape = 's32[1]{0}', space=sflag, size = 0x4, scoped, tag = 'scoped memory for gin_forward_fused.1']
    #allocation10 [shape = 'u8[32768]{0}', space=vmem, size = 0x8000, scoped, tag = 'input window, operand 6, single buffered']
    #allocation11 [shape = 'u8[32768]{0}', space=vmem, size = 0x8000, scoped, tag = 'input window, operand 8, single buffered']
    #allocation12 [shape = 's32[1]{0}', space=sflag, size = 0x4, scoped, tag = 'scoped memory for gin_forward_fused.1']
    #allocation13 [shape = 'u8[32768]{0}', space=vmem, size = 0x8000, scoped, tag = 'input window, operand 10, single buffered']
    #allocation14 [shape = 'u8[32768]{0}', space=vmem, size = 0x8000, scoped, tag = 'input window, operand 12, single buffered']
    #allocation15 [shape = 's32[1]{0}', space=sflag, size = 0x4, scoped, tag = 'scoped memory for gin_forward_fused.1']
    #allocation16 [shape = 'u8[65536]{0}', space=vmem, size = 0x10000, scoped, tag = 'output window, operand 0, single buffered']
    %19 = vsyncpa [#allocation3], 0
    %20 = vsyncpa [#allocation6], 0
    %21 = vsyncpa [#allocation9], 0
    %22 = vsyncpa [#allocation12], 0
    %23 = vsyncpa [#allocation15], 0
    %24 = vsyncpa [#allocation4], 0
    // Predicated region
    $region2: #{gin_forward_fused.1} parent=1 // pred_check
      _
    $region3: #{gin_forward_fused.1} parent=1 // pred_check_branch
      %26 = sbr.rel (0) target = $region5
    $region4: #{gin_forward_fused.1} parent=1 // pred_region
      %s28 = ssub.s32 1024, 1024
      %29 = vsyncadd [#allocation3], %s28
      %s30 = sshll.u32 [#allocation2], 4
      %s31 = int_to_ptr.vmem [resolvable:$true] %s30
      %36 = dma.hbm_to_vmem [thread:$0]  %s0, 1024, %s31, [#allocation3], 64, 64, 4
    $region5: #{gin_forward_fused.1} parent=1 // pred_fallthru
      _
    // Predicated region
    $region6: #{gin_forward_fused.1} parent=1 // pred_check
      _
    $region7: #{gin_forward_fused.1} parent=1 // pred_check_branch
      %38 = sbr.rel (0) target = $region9
    $region8: #{gin_forward_fused.1} parent=1 // pred_region
      %s40 = ssub.s32 1024, 1024
      %41 = vsyncadd [#allocation6], %s40
      %s42 = sshll.u32 [#allocation5], 4
      %s43 = int_to_ptr.vmem [resolvable:$true] %s42
      %48 = dma.hbm_to_vmem [thread:$0]  %s1, 1024, %s43, [#allocation6], 64, 64, 4
    $region9: #{gin_forward_fused.1} parent=1 // pred_fallthru
      _
    // Predicated region
    $region10: #{gin_forward_fused.1} parent=1 // pred_check
      _
    $region11: #{gin_forward_fused.1} parent=1 // pred_check_branch
      %50 = sbr.rel (0) target = $region13
    $region12: #{gin_forward_fused.1} parent=1 // pred_region
      %s52 = ssub.s32 1024, 1024
      %53 = vsyncadd [#allocation6], %s52
      %s54 = sshll.u32 [#allocation7], 4
      %s55 = int_to_ptr.vmem [resolvable:$true] %s54
      %60 = dma.hbm_to_vmem [thread:$0]  %s2, 1024, %s55, [#allocation6], 64, 64, 4
    $region13: #{gin_forward_fused.1} parent=1 // pred_fallthru
      _
    // Predicated region
    $region14: #{gin_forward_fused.1} parent=1 // pred_check
      _
    $region15: #{gin_forward_fused.1} parent=1 // pred_check_branch
      %62 = sbr.rel (0) target = $region17
    $region16: #{gin_forward_fused.1} parent=1 // pred_region
      _
    $region17: #{gin_forward_fused.1} parent=1 // pred_fallthru
      _
    // Predicated region
    $region18: #{gin_forward_fused.1} parent=1 // pred_check
      _
    $region19: #{gin_forward_fused.1} parent=1 // pred_check_branch
      %64 = sbr.rel (0) target = $region21
    $region20: #{gin_forward_fused.1} parent=1 // pred_region
      %s66 = ssub.s32 1024, 1024
      %67 = vsyncadd [#allocation9], %s66
      %s68 = sshll.u32 [#allocation8], 4
      %s69 = int_to_ptr.vmem [resolvable:$true] %s68
      %74 = dma.hbm_to_vmem [thread:$0]  %s4, 1024, %s69, [#allocation9], 64, 64, 4
    $region21: #{gin_forward_fused.1} parent=1 // pred_fallthru
      _
    // Predicated region
    $region22: #{gin_forward_fused.1} parent=1 // pred_check
      _
    $region23: #{gin_forward_fused.1} parent=1 // pred_check_branch
      %76 = sbr.rel (0) target = $region25
    $region24: #{gin_forward_fused.1} parent=1 // pred_region
      _
    $region25: #{gin_forward_fused.1} parent=1 // pred_fallthru
      _
    // Predicated region
    $region26: #{gin_forward_fused.1} parent=1 // pred_check
      _
    $region27: #{gin_forward_fused.1} parent=1 // pred_check_branch
      %78 = sbr.rel (0) target = $region29
    $region28: #{gin_forward_fused.1} parent=1 // pred_region
      %s80 = ssub.s32 1024, 1024
      %81 = vsyncadd [#allocation9], %s80
      %s82 = sshll.u32 [#allocation10], 4
      %s83 = int_to_ptr.vmem [resolvable:$true] %s82
      %88 = dma.hbm_to_vmem [thread:$0]  %s6, 1024, %s83, [#allocation9], 64, 64, 4
    $region29: #{gin_forward_fused.1} parent=1 // pred_fallthru
      _
    // Predicated region
    $region30: #{gin_forward_fused.1} parent=1 // pred_check
      _
    $region31: #{gin_forward_fused.1} parent=1 // pred_check_branch
      %90 = sbr.rel (0) target = $region33
    $region32: #{gin_forward_fused.1} parent=1 // pred_region
      _
    $region33: #{gin_forward_fused.1} parent=1 // pred_fallthru
      _
    // Predicated region
    $region34: #{gin_forward_fused.1} parent=1 // pred_check
      _
    $region35: #{gin_forward_fused.1} parent=1 // pred_check_branch
      %92 = sbr.rel (0) target = $region37
    $region36: #{gin_forward_fused.1} parent=1 // pred_region
      %s94 = ssub.s32 1024, 1024
      %95 = vsyncadd [#allocation12], %s94
      %s96 = sshll.u32 [#allocation11], 4
      %s97 = int_to_ptr.vmem [resolvable:$true] %s96
      %102 = dma.hbm_to_vmem [thread:$0]  %s8, 1024, %s97, [#allocation12], 64, 64, 4
    $region37: #{gin_forward_fused.1} parent=1 // pred_fallthru
      _
    // Predicated region
    $region38: #{gin_forward_fused.1} parent=1 // pred_check
      _
    $region39: #{gin_forward_fused.1} parent=1 // pred_check_branch
      %104 = sbr.rel (0) target = $region41
    $region40: #{gin_forward_fused.1} parent=1 // pred_region
      _
    $region41: #{gin_forward_fused.1} parent=1 // pred_fallthru
      _
    // Predicated region
    $region42: #{gin_forward_fused.1} parent=1 // pred_check
      _
    $region43: #{gin_forward_fused.1} parent=1 // pred_check_branch
      %106 = sbr.rel (0) target = $region45
    $region44: #{gin_forward_fused.1} parent=1 // pred_region
      %s108 = ssub.s32 1024, 1024
      %109 = vsyncadd [#allocation12], %s108
      %s110 = sshll.u32 [#allocation13], 4
      %s111 = int_to_ptr.vmem [resolvable:$true] %s110
      %116 = dma.hbm_to_vmem [thread:$0]  %s10, 1024, %s111, [#allocation12], 64, 64, 4
    $region45: #{gin_forward_fused.1} parent=1 // pred_fallthru
      _
    // Predicated region
    $region46: #{gin_forward_fused.1} parent=1 // pred_check
      _
    $region47: #{gin_forward_fused.1} parent=1 // pred_check_branch
      %118 = sbr.rel (0) target = $region49
    $region48: #{gin_forward_fused.1} parent=1 // pred_region
      _
    $region49: #{gin_forward_fused.1} parent=1 // pred_fallthru
      _
    // Predicated region
    $region50: #{gin_forward_fused.1} parent=1 // pred_check
      _
    $region51: #{gin_forward_fused.1} parent=1 // pred_check_branch
      %120 = sbr.rel (0) target = $region53
    $region52: #{gin_forward_fused.1} parent=1 // pred_region
      %s122 = ssub.s32 1024, 1024
      %123 = vsyncadd [#allocation15], %s122
      %s124 = sshll.u32 [#allocation14], 4
      %s125 = int_to_ptr.vmem [resolvable:$true] %s124
      %130 = dma.hbm_to_vmem [thread:$0]  %s12, 1024, %s125, [#allocation15], 64, 64, 4
    $region53: #{gin_forward_fused.1} parent=1 // pred_fallthru
      _
    // Predicated region
    $region54: #{gin_forward_fused.1} parent=1 // pred_check
      _
    $region55: #{gin_forward_fused.1} parent=1 // pred_check_branch
      %132 = sbr.rel (0) target = $region57
    $region56: #{gin_forward_fused.1} parent=1 // pred_region
      _
    $region57: #{gin_forward_fused.1} parent=1 // pred_fallthru
      _
    // Predicated region
    $region58: #{gin_forward_fused.1} parent=1 // pred_check
      _
    $region59: #{gin_forward_fused.1} parent=1 // pred_check_branch
      %134 = sbr.rel (0) target = $region61
    $region60: #{gin_forward_fused.1} parent=1 // pred_region
      %135 = dma.done [#allocation3], 1024
    $region61: #{gin_forward_fused.1} parent=1 // pred_fallthru
      _
    // Predicated region
    $region62: #{gin_forward_fused.1} parent=1 // pred_check
      _
    $region63: #{gin_forward_fused.1} parent=1 // pred_check_branch
      %137 = sbr.rel (0) target = $region65
    $region64: #{gin_forward_fused.1} parent=1 // pred_region
      %138 = dma.done [#allocation6], 1024
    $region65: #{gin_forward_fused.1} parent=1 // pred_fallthru
      _
    // Predicated region
    $region66: #{gin_forward_fused.1} parent=1 // pred_check
      _
    $region67: #{gin_forward_fused.1} parent=1 // pred_check_branch
      %140 = sbr.rel (0) target = $region69
    $region68: #{gin_forward_fused.1} parent=1 // pred_region
      %141 = dma.done [#allocation6], 1024
    $region69: #{gin_forward_fused.1} parent=1 // pred_fallthru
      _
    // Predicated region
    $region70: #{gin_forward_fused.1} parent=1 // pred_check
      _
    $region71: #{gin_forward_fused.1} parent=1 // pred_check_branch
      %143 = sbr.rel (0) target = $region73
    $region72: #{gin_forward_fused.1} parent=1 // pred_region
      %144 = dma.done [#allocation9], 1024
    $region73: #{gin_forward_fused.1} parent=1 // pred_fallthru
      _
    // Predicated region
    $region74: #{gin_forward_fused.1} parent=1 // pred_check
      _
    $region75: #{gin_forward_fused.1} parent=1 // pred_check_branch
      %146 = sbr.rel (0) target = $region77
    $region76: #{gin_forward_fused.1} parent=1 // pred_region
      %147 = dma.done [#allocation9], 1024
    $region77: #{gin_forward_fused.1} parent=1 // pred_fallthru
      _
    // Predicated region
    $region78: #{gin_forward_fused.1} parent=1 // pred_check
      _
    $region79: #{gin_forward_fused.1} parent=1 // pred_check_branch
      %149 = sbr.rel (0) target = $region81
    $region80: #{gin_forward_fused.1} parent=1 // pred_region
      %150 = dma.done [#allocation12], 1024
    $region81: #{gin_forward_fused.1} parent=1 // pred_fallthru
      _
    // Predicated region
    $region82: #{gin_forward_fused.1} parent=1 // pred_check
      _
    $region83: #{gin_forward_fused.1} parent=1 // pred_check_branch
      %152 = sbr.rel (0) target = $region85
    $region84: #{gin_forward_fused.1} parent=1 // pred_region
      %153 = dma.done [#allocation12], 1024
    $region85: #{gin_forward_fused.1} parent=1 // pred_fallthru
      _
    // Predicated region
    $region86: #{gin_forward_fused.1} parent=1 // pred_check
      _
    $region87: #{gin_forward_fused.1} parent=1 // pred_check_branch
      %155 = sbr.rel (0) target = $region89
    $region88: #{gin_forward_fused.1} parent=1 // pred_region
      %156 = dma.done [#allocation15], 1024
    $region89: #{gin_forward_fused.1} parent=1 // pred_fallthru
      _
    %v158 = vld [vmem:[#allocation2] sm:$0xf]
    %v159 = vld [vmem:[#allocation2 + $0x4] sm:$0xf]
    %v160 = vld [vmem:[#allocation2 + $0x8] sm:$0xf]
    %v161 = vld [vmem:[#allocation2 + $0xc] sm:$0xf]
    %v162 = vld [vmem:[#allocation2 + $0x10] sm:$0xf]
    %v163 = vld [vmem:[#allocation2 + $0x14] sm:$0xf]
    %v164 = vld [vmem:[#allocation2 + $0x18] sm:$0xf]
    %v165 = vld [vmem:[#allocation2 + $0x1c] sm:$0xf]
    %v166 = vld [vmem:[#allocation2 + $0x20] sm:$0xf]
    %v167 = vld [vmem:[#allocation2 + $0x24] sm:$0xf]
    %v168 = vld [vmem:[#allocation2 + $0x28] sm:$0xf]
    %v169 = vld [vmem:[#allocation2 + $0x2c] sm:$0xf]
    %v170 = vld [vmem:[#allocation2 + $0x30] sm:$0xf]
    %v171 = vld [vmem:[#allocation2 + $0x34] sm:$0xf]
    %v172 = vld [vmem:[#allocation2 + $0x38] sm:$0xf]
    %v173 = vld [vmem:[#allocation2 + $0x3c] sm:$0xf]
    %v174 = vld [vmem:[#allocation5] sm:$0xf]
    %v175 = vld [vmem:[#allocation5 + $0x4] sm:$0xf]
    %v176 = vld [vmem:[#allocation5 + $0x8] sm:$0xf]
    %v177 = vld [vmem:[#allocation5 + $0xc] sm:$0xf]
    %v178 = vld [vmem:[#allocation5 + $0x10] sm:$0xf]
    %v179 = vld [vmem:[#allocation5 + $0x14] sm:$0xf]
    %v180 = vld [vmem:[#allocation5 + $0x18] sm:$0xf]
    %v181 = vld [vmem:[#allocation5 + $0x1c] sm:$0xf]
    %v182 = vld [vmem:[#allocation5 + $0x20] sm:$0xf]
    %v183 = vld [vmem:[#allocation5 + $0x24] sm:$0xf]
    %v184 = vld [vmem:[#allocation5 + $0x28] sm:$0xf]
    %v185 = vld [vmem:[#allocation5 + $0x2c] sm:$0xf]
    %v186 = vld [vmem:[#allocation5 + $0x30] sm:$0xf]
    %v187 = vld [vmem:[#allocation5 + $0x34] sm:$0xf]
    %v188 = vld [vmem:[#allocation5 + $0x38] sm:$0xf]
    %v189 = vld [vmem:[#allocation5 + $0x3c] sm:$0xf]
    %v190 = vld [vmem:[#allocation7] sm:$0xf]
    %v191 = vld [vmem:[#allocation7 + $0x4] sm:$0xf]
    %v192 = vld [vmem:[#allocation7 + $0x8] sm:$0xf]
    %v193 = vld [vmem:[#allocation7 + $0xc] sm:$0xf]
    %v194 = vld [vmem:[#allocation7 + $0x10] sm:$0xf]
    %v195 = vld [vmem:[#allocation7 + $0x14] sm:$0xf]
    %v196 = vld [vmem:[#allocation7 + $0x18] sm:$0xf]
    %v197 = vld [vmem:[#allocation7 + $0x1c] sm:$0xf]
    %v198 = vld [vmem:[#allocation7 + $0x20] sm:$0xf]
    %v199 = vld [vmem:[#allocation7 + $0x24] sm:$0xf]
    %v200 = vld [vmem:[#allocation7 + $0x28] sm:$0xf]
    %v201 = vld [vmem:[#allocation7 + $0x2c] sm:$0xf]
    %v202 = vld [vmem:[#allocation7 + $0x30] sm:$0xf]
    %v203 = vld [vmem:[#allocation7 + $0x34] sm:$0xf]
    %v204 = vld [vmem:[#allocation7 + $0x38] sm:$0xf]
    %v205 = vld [vmem:[#allocation7 + $0x3c] sm:$0xf]
    %v206 = vld [vmem:[%s3] sm:$0x1]
    %v207 = vld [vmem:[#allocation8] sm:$0xf]
    %v208 = vld [vmem:[#allocation8 + $0x4] sm:$0xf]
    %v209 = vld [vmem:[#allocation8 + $0x8] sm:$0xf]
    %v210 = vld [vmem:[#allocation8 + $0xc] sm:$0xf]
    %v211 = vld [vmem:[#allocation8 + $0x10] sm:$0xf]
    %v212 = vld [vmem:[#allocation8 + $0x14] sm:$0xf]
    %v213 = vld [vmem:[#allocation8 + $0x18] sm:$0xf]
    %v214 = vld [vmem:[#allocation8 + $0x1c] sm:$0xf]
    %v215 = vld [vmem:[#allocation8 + $0x20] sm:$0xf]
    %v216 = vld [vmem:[#allocation8 + $0x24] sm:$0xf]
    %v217 = vld [vmem:[#allocation8 + $0x28] sm:$0xf]
    %v218 = vld [vmem:[#allocation8 + $0x2c] sm:$0xf]
    %v219 = vld [vmem:[#allocation8 + $0x30] sm:$0xf]
    %v220 = vld [vmem:[#allocation8 + $0x34] sm:$0xf]
    %v221 = vld [vmem:[#allocation8 + $0x38] sm:$0xf]
    %v222 = vld [vmem:[#allocation8 + $0x3c] sm:$0xf]
    %v223 = vld [vmem:[%s5] sm:$0x1]
    %v240 = vunpack.c.l.b16 %v158
    %v241 = vunpack.c.l.b16 %v159
    %v242 = vunpack.c.l.b16 %v160
    %v243 = vunpack.c.l.b16 %v161
    %v244 = vunpack.c.l.b16 %v162
    %v245 = vunpack.c.l.b16 %v163
    %v246 = vunpack.c.l.b16 %v164
    %v247 = vunpack.c.l.b16 %v165
    %v248 = vunpack.c.l.b16 %v166
    %v249 = vunpack.c.l.b16 %v167
    %v250 = vunpack.c.l.b16 %v168
    %v251 = vunpack.c.l.b16 %v169
    %v252 = vunpack.c.l.b16 %v170
    %v253 = vunpack.c.l.b16 %v171
    %v254 = vunpack.c.l.b16 %v172
    %v255 = vunpack.c.l.b16 %v173
    %v256 = vpack.c.b16 %v241, %v240
    %v257 = vpack.c.b16 %v243, %v242
    %v258 = vpack.c.b16 %v245, %v244
    %v259 = vpack.c.b16 %v247, %v246
    %v260 = vpack.c.b16 %v249, %v248
    %v261 = vpack.c.b16 %v251, %v250
    %v262 = vpack.c.b16 %v253, %v252
    %v263 = vpack.c.b16 %v255, %v254
    %v288 = vunpack.c.l.b16 %v174
    %v289 = vunpack.c.l.b16 %v175
    %v290 = vunpack.c.l.b16 %v176
    %v291 = vunpack.c.l.b16 %v177
    %v292 = vunpack.c.l.b16 %v178
    %v293 = vunpack.c.l.b16 %v179
    %v294 = vunpack.c.l.b16 %v180
    %v295 = vunpack.c.l.b16 %v181
    %v296 = vunpack.c.l.b16 %v182
    %v297 = vunpack.c.l.b16 %v183
    %v298 = vunpack.c.l.b16 %v184
    %v299 = vunpack.c.l.b16 %v185
    %v300 = vunpack.c.l.b16 %v186
    %v301 = vunpack.c.l.b16 %v187
    %v302 = vunpack.c.l.b16 %v188
    %v303 = vunpack.c.l.b16 %v189
    %v304 = vpack.c.b16 %v289, %v288
    %v305 = vpack.c.b16 %v291, %v290
    %v306 = vpack.c.b16 %v293, %v292
    %v307 = vpack.c.b16 %v295, %v294
    %v308 = vpack.c.b16 %v297, %v296
    %v309 = vpack.c.b16 %v299, %v298
    %v310 = vpack.c.b16 %v301, %v300
    %v311 = vpack.c.b16 %v303, %v302
    %320 = vmatprep.subr.bf16.mxu0 0
    %321 = vmatpush1.bf16.msra.mxu0 %v304
    %322 = vmatprep.subr.bf16.mxu0 0
    %323 = vmatpush1.bf16.msra.mxu0 %v305
    %324 = vmatprep.subr.bf16.mxu0 0
    %325 = vmatpush1.bf16.msra.mxu0 %v306
    %326 = vmatprep.subr.bf16.mxu0 0
    %327 = vmatpush1.bf16.msra.mxu0 %v307
    %328 = vmatprep.subr.bf16.mxu0 0
    %329 = vmatpush1.bf16.msra.mxu0 %v308
    %330 = vmatprep.subr.bf16.mxu0 0
    %331 = vmatpush1.bf16.msra.mxu0 %v309
    %332 = vmatprep.subr.bf16.mxu0 0
    %333 = vmatpush1.bf16.msra.mxu0 %v310
    %334 = vmatprep.subr.bf16.mxu0 0
    %335 = vmatpush1.bf16.msra.mxu0 %v311
    %336 = vmatprep.subr.bf16.mxu0 0
    %337 = vmatpush1.bf16.msra.mxu0 0
    %338 = vmatprep.subr.bf16.mxu0 0
    %339 = vmatpush1.bf16.msra.mxu0 0
    %340 = vmatprep.subr.bf16.mxu0 0
    %341 = vmatpush1.bf16.msra.mxu0 0
    %342 = vmatprep.subr.bf16.mxu0 0
    %343 = vmatpush1.bf16.msra.mxu0 0
    %344 = vmatprep.subr.bf16.mxu0 0
    %345 = vmatpush1.bf16.msra.mxu0 0
    %346 = vmatprep.subr.bf16.mxu0 0
    %347 = vmatpush1.bf16.msra.mxu0 0
    %348 = vmatprep.subr.bf16.mxu0 0
    %349 = vmatpush1.bf16.msra.mxu0 0
    %350 = vmatprep.subr.bf16.mxu0 0
    %351 = vmatpush1.bf16.msra.mxu0 0
    %352 = vmatprep.mubr.bf16.mxu0 0
    %353 = vmatmul.mubr.bf16.gmra.mrb[0].mxu0 %v256
    %v354 = vpop.f32.mrb[0].mxu0
    %v355 = vadd.f32 0.0, %v354
    %v356 = vpop.f32.mrb[0].mxu0
    %v357 = vpop.f32.mrb[0].mxu0
    %v358 = vadd.f32 0.0, %v357
    %v359 = vpop.f32.mrb[0].mxu0
    %360 = vmatprep.mubr.bf16.mxu0 0
    %361 = vmatmul.mubr.bf16.gmra.mrb[0].mxu0 %v257
    %v362 = vpop.f32.mrb[0].mxu0
    %v363 = vadd.f32 0.0, %v362
    %v364 = vpop.f32.mrb[0].mxu0
    %v365 = vpop.f32.mrb[0].mxu0
    %v366 = vadd.f32 0.0, %v365
    %v367 = vpop.f32.mrb[0].mxu0
    %368 = vmatprep.mubr.bf16.mxu0 0
    %369 = vmatmul.mubr.bf16.gmra.mrb[0].mxu0 %v258
    %v370 = vpop.f32.mrb[0].mxu0
    %v371 = vadd.f32 0.0, %v370
    %v372 = vpop.f32.mrb[0].mxu0
    %v373 = vpop.f32.mrb[0].mxu0
    %v374 = vadd.f32 0.0, %v373
    %v375 = vpop.f32.mrb[0].mxu0
    %376 = vmatprep.mubr.bf16.mxu0 0
    %377 = vmatmul.mubr.bf16.gmra.mrb[0].mxu0 %v259
    %v378 = vpop.f32.mrb[0].mxu0
    %v379 = vadd.f32 0.0, %v378
    %v380 = vpop.f32.mrb[0].mxu0
    %v381 = vpop.f32.mrb[0].mxu0
    %v382 = vadd.f32 0.0, %v381
    %v383 = vpop.f32.mrb[0].mxu0
    %384 = vmatprep.mubr.bf16.mxu0 0
    %385 = vmatmul.mubr.bf16.gmra.mrb[0].mxu0 %v260
    %v386 = vpop.f32.mrb[0].mxu0
    %v387 = vadd.f32 0.0, %v386
    %v388 = vpop.f32.mrb[0].mxu0
    %v389 = vpop.f32.mrb[0].mxu0
    %v390 = vadd.f32 0.0, %v389
    %v391 = vpop.f32.mrb[0].mxu0
    %392 = vmatprep.mubr.bf16.mxu0 0
    %393 = vmatmul.mubr.bf16.gmra.mrb[0].mxu0 %v261
    %v394 = vpop.f32.mrb[0].mxu0
    %v395 = vadd.f32 0.0, %v394
    %v396 = vpop.f32.mrb[0].mxu0
    %v397 = vpop.f32.mrb[0].mxu0
    %v398 = vadd.f32 0.0, %v397
    %v399 = vpop.f32.mrb[0].mxu0
    %400 = vmatprep.mubr.bf16.mxu0 0
    %401 = vmatmul.mubr.bf16.gmra.mrb[0].mxu0 %v262
    %v402 = vpop.f32.mrb[0].mxu0
    %v403 = vadd.f32 0.0, %v402
    %v404 = vpop.f32.mrb[0].mxu0
    %v405 = vpop.f32.mrb[0].mxu0
    %v406 = vadd.f32 0.0, %v405
    %v407 = vpop.f32.mrb[0].mxu0
    %408 = vmatprep.mubr.bf16.mxu0 0
    %409 = vmatmul.mubr.bf16.gmra.mrb[0].mxu0 %v263
    %v410 = vpop.f32.mrb[0].mxu0
    %v411 = vadd.f32 0.0, %v410
    %v412 = vpop.f32.mrb[0].mxu0
    %v413 = vpop.f32.mrb[0].mxu0
    %v414 = vadd.f32 0.0, %v413
    %v415 = vpop.f32.mrb[0].mxu0
    %416 = vdwg.mxu0
    %v417 = vpack.c.bf16 %v358, %v355
    %v418 = vpack.c.bf16 %v366, %v363
    %v419 = vpack.c.bf16 %v374, %v371
    %v420 = vpack.c.bf16 %v382, %v379
    %v421 = vpack.c.bf16 %v390, %v387
    %v422 = vpack.c.bf16 %v398, %v395
    %v423 = vpack.c.bf16 %v406, %v403
    %v424 = vpack.c.bf16 %v414, %v411
    %v426 = vlaneseq
    %v427 = vshrl.u32 %v426, 7
    %v428 = vsub.s32 0, %v427
    %v429 = vrot.slane %v206, %v428
    %v447 = vunpack.c.l.b16 %v190
    %v448 = vunpack.c.l.b16 %v191
    %v449 = vunpack.c.l.b16 %v192
    %v450 = vunpack.c.l.b16 %v193
    %v451 = vunpack.c.l.b16 %v194
    %v452 = vunpack.c.l.b16 %v195
    %v453 = vunpack.c.l.b16 %v196
    %v454 = vunpack.c.l.b16 %v197
    %v455 = vunpack.c.l.b16 %v198
    %v456 = vunpack.c.l.b16 %v199
    %v457 = vunpack.c.l.b16 %v200
    %v458 = vunpack.c.l.b16 %v201
    %v459 = vunpack.c.l.b16 %v202
    %v460 = vunpack.c.l.b16 %v203
    %v461 = vunpack.c.l.b16 %v204
    %v462 = vunpack.c.l.b16 %v205
    %v463 = vpack.c.b16 %v448, %v447
    %v464 = vpack.c.b16 %v450, %v449
    %v465 = vpack.c.b16 %v452, %v451
    %v466 = vpack.c.b16 %v454, %v453
    %v467 = vpack.c.b16 %v456, %v455
    %v468 = vpack.c.b16 %v458, %v457
    %v469 = vpack.c.b16 %v460, %v459
    %v470 = vpack.c.b16 %v462, %v461
    %479 = vmatprep.subr.bf16.mxu0 0
    %480 = vmatpush1.bf16.msra.mxu0 %v463
    %481 = vmatprep.subr.bf16.mxu0 0
    %482 = vmatpush1.bf16.msra.mxu0 %v464
    %483 = vmatprep.subr.bf16.mxu0 0
    %484 = vmatpush1.bf16.msra.mxu0 %v465
    %485 = vmatprep.subr.bf16.mxu0 0
    %486 = vmatpush1.bf16.msra.mxu0 %v466
    %487 = vmatprep.subr.bf16.mxu0 0
    %488 = vmatpush1.bf16.msra.mxu0 %v467
    %489 = vmatprep.subr.bf16.mxu0 0
    %490 = vmatpush1.bf16.msra.mxu0 %v468
    %491 = vmatprep.subr.bf16.mxu0 0
    %492 = vmatpush1.bf16.msra.mxu0 %v469
    %493 = vmatprep.subr.bf16.mxu0 0
    %494 = vmatpush1.bf16.msra.mxu0 %v470
    %495 = vmatprep.subr.bf16.mxu0 0
    %496 = vmatpush1.bf16.msra.mxu0 0
    %497 = vmatprep.subr.bf16.mxu0 0
    %498 = vmatpush1.bf16.msra.mxu0 0
    %499 = vmatprep.subr.bf16.mxu0 0
    %500 = vmatpush1.bf16.msra.mxu0 0
    %501 = vmatprep.subr.bf16.mxu0 0
    %502 = vmatpush1.bf16.msra.mxu0 0
    %503 = vmatprep.subr.bf16.mxu0 0
    %504 = vmatpush1.bf16.msra.mxu0 0
    %505 = vmatprep.subr.bf16.mxu0 0
    %506 = vmatpush1.bf16.msra.mxu0 0
    %507 = vmatprep.subr.bf16.mxu0 0
    %508 = vmatpush1.bf16.msra.mxu0 0
    %509 = vmatprep.subr.bf16.mxu0 0
    %510 = vmatpush1.bf16.msra.mxu0 0
    %511 = vmatprep.mubr.bf16.mxu0 0
    %512 = vmatmul.mubr.bf16.gmra.mrb[0].mxu0 %v417
    %v513 = vpop.f32.mrb[0].mxu0
    %v514 = vadd.f32 %v429, %v513
    %v515 = vpop.f32.mrb[0].mxu0
    %v516 = vpop.f32.mrb[0].mxu0
    %v517 = vadd.f32 %v429, %v516
    %v518 = vpop.f32.mrb[0].mxu0
    %519 = vmatprep.mubr.bf16.mxu0 0
    %520 = vmatmul.mubr.bf16.gmra.mrb[0].mxu0 %v418
    %v521 = vpop.f32.mrb[0].mxu0
    %v522 = vadd.f32 %v429, %v521
    %v523 = vpop.f32.mrb[0].mxu0
    %v524 = vpop.f32.mrb[0].mxu0
    %v525 = vadd.f32 %v429, %v524
    %v526 = vpop.f32.mrb[0].mxu0
    %527 = vmatprep.mubr.bf16.mxu0 0
    %528 = vmatmul.mubr.bf16.gmra.mrb[0].mxu0 %v419
    %v529 = vpop.f32.mrb[0].mxu0
    %v530 = vadd.f32 %v429, %v529
    %v531 = vpop.f32.mrb[0].mxu0
    %v532 = vpop.f32.mrb[0].mxu0
    %v533 = vadd.f32 %v429, %v532
    %v534 = vpop.f32.mrb[0].mxu0
    %535 = vmatprep.mubr.bf16.mxu0 0
    %536 = vmatmul.mubr.bf16.gmra.mrb[0].mxu0 %v420
    %v537 = vpop.f32.mrb[0].mxu0
    %v538 = vadd.f32 %v429, %v537
    %v539 = vpop.f32.mrb[0].mxu0
    %v540 = vpop.f32.mrb[0].mxu0
    %v541 = vadd.f32 %v429, %v540
    %v542 = vpop.f32.mrb[0].mxu0
    %543 = vmatprep.mubr.bf16.mxu0 0
    %544 = vmatmul.mubr.bf16.gmra.mrb[0].mxu0 %v421
    %v545 = vpop.f32.mrb[0].mxu0
    %v546 = vadd.f32 %v429, %v545
    %v547 = vpop.f32.mrb[0].mxu0
    %v548 = vpop.f32.mrb[0].mxu0
    %v549 = vadd.f32 %v429, %v548
    %v550 = vpop.f32.mrb[0].mxu0
    %551 = vmatprep.mubr.bf16.mxu0 0
    %552 = vmatmul.mubr.bf16.gmra.mrb[0].mxu0 %v422
    %v553 = vpop.f32.mrb[0].mxu0
    %v554 = vadd.f32 %v429, %v553
    %v555 = vpop.f32.mrb[0].mxu0
    %v556 = vpop.f32.mrb[0].mxu0
    %v557 = vadd.f32 %v429, %v556
    %v558 = vpop.f32.mrb[0].mxu0
    %559 = vmatprep.mubr.bf16.mxu0 0
    %560 = vmatmul.mubr.bf16.gmra.mrb[0].mxu0 %v423
    %v561 = vpop.f32.mrb[0].mxu0
    %v562 = vadd.f32 %v429, %v561
    %v563 = vpop.f32.mrb[0].mxu0
    %v564 = vpop.f32.mrb[0].mxu0
    %v565 = vadd.f32 %v429, %v564
    %v566 = vpop.f32.mrb[0].mxu0
    %567 = vmatprep.mubr.bf16.mxu0 0
    %568 = vmatmul.mubr.bf16.gmra.mrb[0].mxu0 %v424
    %v569 = vpop.f32.mrb[0].mxu0
    %v570 = vadd.f32 %v429, %v569
    %v571 = vpop.f32.mrb[0].mxu0
    %v572 = vpop.f32.mrb[0].mxu0
    %v573 = vadd.f32 %v429, %v572
    %v574 = vpop.f32.mrb[0].mxu0
    %575 = vdwg.mxu0
    %v576 = vmax.f32 %v514, 0.0
    %v577 = vmax.f32 %v517, 0.0
    %v578 = vmax.f32 %v522, 0.0
    %v579 = vmax.f32 %v525, 0.0
    %v580 = vmax.f32 %v530, 0.0
    %v581 = vmax.f32 %v533, 0.0
    %v582 = vmax.f32 %v538, 0.0
    %v583 = vmax.f32 %v541, 0.0
    %v584 = vmax.f32 %v546, 0.0
    %v585 = vmax.f32 %v549, 0.0
    %v586 = vmax.f32 %v554, 0.0
    %v587 = vmax.f32 %v557, 0.0
    %v588 = vmax.f32 %v562, 0.0
    %v589 = vmax.f32 %v565, 0.0
    %v590 = vmax.f32 %v570, 0.0
    %v591 = vmax.f32 %v573, 0.0
    %v592 = vpack.c.bf16 %v577, %v576
    %v593 = vpack.c.bf16 %v579, %v578
    %v594 = vpack.c.bf16 %v581, %v580
    %v595 = vpack.c.bf16 %v583, %v582
    %v596 = vpack.c.bf16 %v585, %v584
    %v597 = vpack.c.bf16 %v587, %v586
    %v598 = vpack.c.bf16 %v589, %v588
    %v599 = vpack.c.bf16 %v591, %v590
    %v601 = vlaneseq
    %v602 = vshrl.u32 %v601, 7
    %v603 = vsub.s32 0, %v602
    %v604 = vrot.slane %v223, %v603
    %v622 = vunpack.c.l.b16 %v207
    %v623 = vunpack.c.l.b16 %v208
    %v624 = vunpack.c.l.b16 %v209
    %v625 = vunpack.c.l.b16 %v210
    %v626 = vunpack.c.l.b16 %v211
    %v627 = vunpack.c.l.b16 %v212
    %v628 = vunpack.c.l.b16 %v213
    %v629 = vunpack.c.l.b16 %v214
    %v630 = vunpack.c.l.b16 %v215
    %v631 = vunpack.c.l.b16 %v216
    %v632 = vunpack.c.l.b16 %v217
    %v633 = vunpack.c.l.b16 %v218
    %v634 = vunpack.c.l.b16 %v219
    %v635 = vunpack.c.l.b16 %v220
    %v636 = vunpack.c.l.b16 %v221
    %v637 = vunpack.c.l.b16 %v222
    %v638 = vpack.c.b16 %v623, %v622
    %v639 = vpack.c.b16 %v625, %v624
    %v640 = vpack.c.b16 %v627, %v626
    %v641 = vpack.c.b16 %v629, %v628
    %v642 = vpack.c.b16 %v631, %v630
    %v643 = vpack.c.b16 %v633, %v632
    %v644 = vpack.c.b16 %v635, %v634
    %v645 = vpack.c.b16 %v637, %v636
    %654 = vmatprep.subr.bf16.mxu0 0
    %655 = vmatpush1.bf16.msra.mxu0 %v638
    %656 = vmatprep.subr.bf16.mxu0 0
    %657 = vmatpush1.bf16.msra.mxu0 %v639
    %658 = vmatprep.subr.bf16.mxu0 0
    %659 = vmatpush1.bf16.msra.mxu0 %v640
    %660 = vmatprep.subr.bf16.mxu0 0
    %661 = vmatpush1.bf16.msra.mxu0 %v641
    %662 = vmatprep.subr.bf16.mxu0 0
    %663 = vmatpush1.bf16.msra.mxu0 %v642
    %664 = vmatprep.subr.bf16.mxu0 0
    %665 = vmatpush1.bf16.msra.mxu0 %v643
    %666 = vmatprep.subr.bf16.mxu0 0
    %667 = vmatpush1.bf16.msra.mxu0 %v644
    %668 = vmatprep.subr.bf16.mxu0 0
    %669 = vmatpush1.bf16.msra.mxu0 %v645
    %670 = vmatprep.subr.bf16.mxu0 0
    %671 = vmatpush1.bf16.msra.mxu0 0
    %672 = vmatprep.subr.bf16.mxu0 0
    %673 = vmatpush1.bf16.msra.mxu0 0
    %674 = vmatprep.subr.bf16.mxu0 0
    %675 = vmatpush1.bf16.msra.mxu0 0
    %676 = vmatprep.subr.bf16.mxu0 0
    %677 = vmatpush1.bf16.msra.mxu0 0
    %678 = vmatprep.subr.bf16.mxu0 0
    %679 = vmatpush1.bf16.msra.mxu0 0
    %680 = vmatprep.subr.bf16.mxu0 0
    %681 = vmatpush1.bf16.msra.mxu0 0
    %682 = vmatprep.subr.bf16.mxu0 0
    %683 = vmatpush1.bf16.msra.mxu0 0
    %684 = vmatprep.subr.bf16.mxu0 0
    %685 = vmatpush1.bf16.msra.mxu0 0
    %686 = vmatprep.mubr.bf16.mxu0 0
    %687 = vmatmul.mubr.bf16.gmra.mrb[0].mxu0 %v592
    %v688 = vpop.f32.mrb[0].mxu0
    %v689 = vadd.f32 %v604, %v688
    %v690 = vpop.f32.mrb[0].mxu0
    %v691 = vpop.f32.mrb[0].mxu0
    %v692 = vadd.f32 %v604, %v691
    %v693 = vpop.f32.mrb[0].mxu0
    %694 = vmatprep.mubr.bf16.mxu0 0
    %695 = vmatmul.mubr.bf16.gmra.mrb[0].mxu0 %v593
    %v696 = vpop.f32.mrb[0].mxu0
    %v697 = vadd.f32 %v604, %v696
    %v698 = vpop.f32.mrb[0].mxu0
    %v699 = vpop.f32.mrb[0].mxu0
    %v700 = vadd.f32 %v604, %v699
    %v701 = vpop.f32.mrb[0].mxu0
    %702 = vmatprep.mubr.bf16.mxu0 0
    %703 = vmatmul.mubr.bf16.gmra.mrb[0].mxu0 %v594
    %v704 = vpop.f32.mrb[0].mxu0
    %v705 = vadd.f32 %v604, %v704
    %v706 = vpop.f32.mrb[0].mxu0
    %v707 = vpop.f32.mrb[0].mxu0
    %v708 = vadd.f32 %v604, %v707
    %v709 = vpop.f32.mrb[0].mxu0
    %710 = vmatprep.mubr.bf16.mxu0 0
    %711 = vmatmul.mubr.bf16.gmra.mrb[0].mxu0 %v595
    %v712 = vpop.f32.mrb[0].mxu0
    %v713 = vadd.f32 %v604, %v712
    %v714 = vpop.f32.mrb[0].mxu0
    %v715 = vpop.f32.mrb[0].mxu0
    %v716 = vadd.f32 %v604, %v715
    %v717 = vpop.f32.mrb[0].mxu0
    %718 = vmatprep.mubr.bf16.mxu0 0
    %719 = vmatmul.mubr.bf16.gmra.mrb[0].mxu0 %v596
    %v720 = vpop.f32.mrb[0].mxu0
    %v721 = vadd.f32 %v604, %v720
    %v722 = vpop.f32.mrb[0].mxu0
    %v723 = vpop.f32.mrb[0].mxu0
    %v724 = vadd.f32 %v604, %v723
    %v725 = vpop.f32.mrb[0].mxu0
    %726 = vmatprep.mubr.bf16.mxu0 0
    %727 = vmatmul.mubr.bf16.gmra.mrb[0].mxu0 %v597
    %v728 = vpop.f32.mrb[0].mxu0
    %v729 = vadd.f32 %v604, %v728
    %v730 = vpop.f32.mrb[0].mxu0
    %v731 = vpop.f32.mrb[0].mxu0
    %v732 = vadd.f32 %v604, %v731
    %v733 = vpop.f32.mrb[0].mxu0
    %734 = vmatprep.mubr.bf16.mxu0 0
    %735 = vmatmul.mubr.bf16.gmra.mrb[0].mxu0 %v598
    %v736 = vpop.f32.mrb[0].mxu0
    %v737 = vadd.f32 %v604, %v736
    %v738 = vpop.f32.mrb[0].mxu0
    %v739 = vpop.f32.mrb[0].mxu0
    %v740 = vadd.f32 %v604, %v739
    %v741 = vpop.f32.mrb[0].mxu0
    %742 = vmatprep.mubr.bf16.mxu0 0
    %743 = vmatmul.mubr.bf16.gmra.mrb[0].mxu0 %v599
    %v744 = vpop.f32.mrb[0].mxu0
    %v745 = vadd.f32 %v604, %v744
    %v746 = vpop.f32.mrb[0].mxu0
    %v747 = vpop.f32.mrb[0].mxu0
    %v748 = vadd.f32 %v604, %v747
    %v749 = vpop.f32.mrb[0].mxu0
    %750 = vdwg.mxu0
    %v751 = vmax.f32 %v689, 0.0
    %v752 = vmax.f32 %v692, 0.0
    %v753 = vmax.f32 %v697, 0.0
    %v754 = vmax.f32 %v700, 0.0
    %v755 = vmax.f32 %v705, 0.0
    %v756 = vmax.f32 %v708, 0.0
    %v757 = vmax.f32 %v713, 0.0
    %v758 = vmax.f32 %v716, 0.0
    %v759 = vmax.f32 %v721, 0.0
    %v760 = vmax.f32 %v724, 0.0
    %v761 = vmax.f32 %v729, 0.0
    %v762 = vmax.f32 %v732, 0.0
    %v763 = vmax.f32 %v737, 0.0
    %v764 = vmax.f32 %v740, 0.0
    %v765 = vmax.f32 %v745, 0.0
    %v766 = vmax.f32 %v748, 0.0
    %v767 = vpack.c.bf16 %v752, %v751
    %v768 = vpack.c.bf16 %v754, %v753
    %v769 = vpack.c.bf16 %v756, %v755
    %v770 = vpack.c.bf16 %v758, %v757
    %v771 = vpack.c.bf16 %v760, %v759
    %v772 = vpack.c.bf16 %v762, %v761
    %v773 = vpack.c.bf16 %v764, %v763
    %v774 = vpack.c.bf16 %v766, %v765
    %v775 = vld [vmem:[#allocation10] sm:$0xf]
    %v776 = vld [vmem:[#allocation10 + $0x4] sm:$0xf]
    %v777 = vld [vmem:[#allocation10 + $0x8] sm:$0xf]
    %v778 = vld [vmem:[#allocation10 + $0xc] sm:$0xf]
    %v779 = vld [vmem:[#allocation10 + $0x10] sm:$0xf]
    %v780 = vld [vmem:[#allocation10 + $0x14] sm:$0xf]
    %v781 = vld [vmem:[#allocation10 + $0x18] sm:$0xf]
    %v782 = vld [vmem:[#allocation10 + $0x1c] sm:$0xf]
    %v783 = vld [vmem:[#allocation10 + $0x20] sm:$0xf]
    %v784 = vld [vmem:[#allocation10 + $0x24] sm:$0xf]
    %v785 = vld [vmem:[#allocation10 + $0x28] sm:$0xf]
    %v786 = vld [vmem:[#allocation10 + $0x2c] sm:$0xf]
    %v787 = vld [vmem:[#allocation10 + $0x30] sm:$0xf]
    %v788 = vld [vmem:[#allocation10 + $0x34] sm:$0xf]
    %v789 = vld [vmem:[#allocation10 + $0x38] sm:$0xf]
    %v790 = vld [vmem:[#allocation10 + $0x3c] sm:$0xf]
    %v791 = vld [vmem:[%s7] sm:$0x1]
    %v792 = vld [vmem:[#allocation11] sm:$0xf]
    %v793 = vld [vmem:[#allocation11 + $0x4] sm:$0xf]
    %v794 = vld [vmem:[#allocation11 + $0x8] sm:$0xf]
    %v795 = vld [vmem:[#allocation11 + $0xc] sm:$0xf]
    %v796 = vld [vmem:[#allocation11 + $0x10] sm:$0xf]
    %v797 = vld [vmem:[#allocation11 + $0x14] sm:$0xf]
    %v798 = vld [vmem:[#allocation11 + $0x18] sm:$0xf]
    %v799 = vld [vmem:[#allocation11 + $0x1c] sm:$0xf]
    %v800 = vld [vmem:[#allocation11 + $0x20] sm:$0xf]
    %v801 = vld [vmem:[#allocation11 + $0x24] sm:$0xf]
    %v802 = vld [vmem:[#allocation11 + $0x28] sm:$0xf]
    %v803 = vld [vmem:[#allocation11 + $0x2c] sm:$0xf]
    %v804 = vld [vmem:[#allocation11 + $0x30] sm:$0xf]
    %v805 = vld [vmem:[#allocation11 + $0x34] sm:$0xf]
    %v806 = vld [vmem:[#allocation11 + $0x38] sm:$0xf]
    %v807 = vld [vmem:[#allocation11 + $0x3c] sm:$0xf]
    %v808 = vld [vmem:[%s9] sm:$0x1]
    %809 = vmatprep.subr.bf16.mxu0 0
    %810 = vmatpush1.bf16.msra.mxu0 %v767
    %811 = vmatprep.subr.bf16.mxu0 0
    %812 = vmatpush1.bf16.msra.mxu0 %v768
    %813 = vmatprep.subr.bf16.mxu0 0
    %814 = vmatpush1.bf16.msra.mxu0 %v769
    %815 = vmatprep.subr.bf16.mxu0 0
    %816 = vmatpush1.bf16.msra.mxu0 %v770
    %817 = vmatprep.subr.bf16.mxu0 0
    %818 = vmatpush1.bf16.msra.mxu0 %v771
    %819 = vmatprep.subr.bf16.mxu0 0
    %820 = vmatpush1.bf16.msra.mxu0 %v772
    %821 = vmatprep.subr.bf16.mxu0 0
    %822 = vmatpush1.bf16.msra.mxu0 %v773
    %823 = vmatprep.subr.bf16.mxu0 0
    %824 = vmatpush1.bf16.msra.mxu0 %v774
    %825 = vmatprep.subr.bf16.mxu0 0
    %826 = vmatpush1.bf16.msra.mxu0 0
    %827 = vmatprep.subr.bf16.mxu0 0
    %828 = vmatpush1.bf16.msra.mxu0 0
    %829 = vmatprep.subr.bf16.mxu0 0
    %830 = vmatpush1.bf16.msra.mxu0 0
    %831 = vmatprep.subr.bf16.mxu0 0
    %832 = vmatpush1.bf16.msra.mxu0 0
    %833 = vmatprep.subr.bf16.mxu0 0
    %834 = vmatpush1.bf16.msra.mxu0 0
    %835 = vmatprep.subr.bf16.mxu0 0
    %836 = vmatpush1.bf16.msra.mxu0 0
    %837 = vmatprep.subr.bf16.mxu0 0
    %838 = vmatpush1.bf16.msra.mxu0 0
    %839 = vmatprep.subr.bf16.mxu0 0
    %840 = vmatpush1.bf16.msra.mxu0 0
    %841 = vmatprep.mubr.bf16.mxu0 0
    %842 = vmatmul.mubr.bf16.gmra.mrb[0].mxu0 %v256
    %v843 = vpop.f32.mrb[0].mxu0
    %v844 = vadd.f32 0.0, %v843
    %v845 = vpop.f32.mrb[0].mxu0
    %v846 = vpop.f32.mrb[0].mxu0
    %v847 = vadd.f32 0.0, %v846
    %v848 = vpop.f32.mrb[0].mxu0
    %849 = vmatprep.mubr.bf16.mxu0 0
    %850 = vmatmul.mubr.bf16.gmra.mrb[0].mxu0 %v257
    %v851 = vpop.f32.mrb[0].mxu0
    %v852 = vadd.f32 0.0, %v851
    %v853 = vpop.f32.mrb[0].mxu0
    %v854 = vpop.f32.mrb[0].mxu0
    %v855 = vadd.f32 0.0, %v854
    %v856 = vpop.f32.mrb[0].mxu0
    %857 = vmatprep.mubr.bf16.mxu0 0
    %858 = vmatmul.mubr.bf16.gmra.mrb[0].mxu0 %v258
    %v859 = vpop.f32.mrb[0].mxu0
    %v860 = vadd.f32 0.0, %v859
    %v861 = vpop.f32.mrb[0].mxu0
    %v862 = vpop.f32.mrb[0].mxu0
    %v863 = vadd.f32 0.0, %v862
    %v864 = vpop.f32.mrb[0].mxu0
    %865 = vmatprep.mubr.bf16.mxu0 0
    %866 = vmatmul.mubr.bf16.gmra.mrb[0].mxu0 %v259
    %v867 = vpop.f32.mrb[0].mxu0
    %v868 = vadd.f32 0.0, %v867
    %v869 = vpop.f32.mrb[0].mxu0
    %v870 = vpop.f32.mrb[0].mxu0
    %v871 = vadd.f32 0.0, %v870
    %v872 = vpop.f32.mrb[0].mxu0
    %873 = vmatprep.mubr.bf16.mxu0 0
    %874 = vmatmul.mubr.bf16.gmra.mrb[0].mxu0 %v260
    %v875 = vpop.f32.mrb[0].mxu0
    %v876 = vadd.f32 0.0, %v875
    %v877 = vpop.f32.mrb[0].mxu0
    %v878 = vpop.f32.mrb[0].mxu0
    %v879 = vadd.f32 0.0, %v878
    %v880 = vpop.f32.mrb[0].mxu0
    %881 = vmatprep.mubr.bf16.mxu0 0
    %882 = vmatmul.mubr.bf16.gmra.mrb[0].mxu0 %v261
    %v883 = vpop.f32.mrb[0].mxu0
    %v884 = vadd.f32 0.0, %v883
    %v885 = vpop.f32.mrb[0].mxu0
    %v886 = vpop.f32.mrb[0].mxu0
    %v887 = vadd.f32 0.0, %v886
    %v888 = vpop.f32.mrb[0].mxu0
    %889 = vmatprep.mubr.bf16.mxu0 0
    %890 = vmatmul.mubr.bf16.gmra.mrb[0].mxu0 %v262
    %v891 = vpop.f32.mrb[0].mxu0
    %v892 = vadd.f32 0.0, %v891
    %v893 = vpop.f32.mrb[0].mxu0
    %v894 = vpop.f32.mrb[0].mxu0
    %v895 = vadd.f32 0.0, %v894
    %v896 = vpop.f32.mrb[0].mxu0
    %897 = vmatprep.mubr.bf16.mxu0 0
    %898 = vmatmul.mubr.bf16.gmra.mrb[0].mxu0 %v263
    %v899 = vpop.f32.mrb[0].mxu0
    %v900 = vadd.f32 0.0, %v899
    %v901 = vpop.f32.mrb[0].mxu0
    %v902 = vpop.f32.mrb[0].mxu0
    %v903 = vadd.f32 0.0, %v902
    %v904 = vpop.f32.mrb[0].mxu0
    %905 = vdwg.mxu0
    %v906 = vpack.c.bf16 %v847, %v844
    %v907 = vpack.c.bf16 %v855, %v852
    %v908 = vpack.c.bf16 %v863, %v860
    %v909 = vpack.c.bf16 %v871, %v868
    %v910 = vpack.c.bf16 %v879, %v876
    %v911 = vpack.c.bf16 %v887, %v884
    %v912 = vpack.c.bf16 %v895, %v892
    %v913 = vpack.c.bf16 %v903, %v900
    %v915 = vlaneseq
    %v916 = vshrl.u32 %v915, 7
    %v917 = vsub.s32 0, %v916
    %v918 = vrot.slane %v791, %v917
    %v936 = vunpack.c.l.b16 %v775
    %v937 = vunpack.c.l.b16 %v776
    %v938 = vunpack.c.l.b16 %v777
    %v939 = vunpack.c.l.b16 %v778
    %v940 = vunpack.c.l.b16 %v779
    %v941 = vunpack.c.l.b16 %v780
    %v942 = vunpack.c.l.b16 %v781
    %v943 = vunpack.c.l.b16 %v782
    %v944 = vunpack.c.l.b16 %v783
    %v945 = vunpack.c.l.b16 %v784
    %v946 = vunpack.c.l.b16 %v785
    %v947 = vunpack.c.l.b16 %v786
    %v948 = vunpack.c.l.b16 %v787
    %v949 = vunpack.c.l.b16 %v788
    %v950 = vunpack.c.l.b16 %v789
    %v951 = vunpack.c.l.b16 %v790
    %v952 = vpack.c.b16 %v937, %v936
    %v953 = vpack.c.b16 %v939, %v938
    %v954 = vpack.c.b16 %v941, %v940
    %v955 = vpack.c.b16 %v943, %v942
    %v956 = vpack.c.b16 %v945, %v944
    %v957 = vpack.c.b16 %v947, %v946
    %v958 = vpack.c.b16 %v949, %v948
    %v959 = vpack.c.b16 %v951, %v950
    %968 = vmatprep.subr.bf16.mxu0 0
    %969 = vmatpush1.bf16.msra.mxu0 %v952
    %970 = vmatprep.subr.bf16.mxu0 0
    %971 = vmatpush1.bf16.msra.mxu0 %v953
    %972 = vmatprep.subr.bf16.mxu0 0
    %973 = vmatpush1.bf16.msra.mxu0 %v954
    %974 = vmatprep.subr.bf16.mxu0 0
    %975 = vmatpush1.bf16.msra.mxu0 %v955
    %976 = vmatprep.subr.bf16.mxu0 0
    %977 = vmatpush1.bf16.msra.mxu0 %v956
    %978 = vmatprep.subr.bf16.mxu0 0
    %979 = vmatpush1.bf16.msra.mxu0 %v957
    %980 = vmatprep.subr.bf16.mxu0 0
    %981 = vmatpush1.bf16.msra.mxu0 %v958
    %982 = vmatprep.subr.bf16.mxu0 0
    %983 = vmatpush1.bf16.msra.mxu0 %v959
    %984 = vmatprep.subr.bf16.mxu0 0
    %985 = vmatpush1.bf16.msra.mxu0 0
    %986 = vmatprep.subr.bf16.mxu0 0
    %987 = vmatpush1.bf16.msra.mxu0 0
    %988 = vmatprep.subr.bf16.mxu0 0
    %989 = vmatpush1.bf16.msra.mxu0 0
    %990 = vmatprep.subr.bf16.mxu0 0
    %991 = vmatpush1.bf16.msra.mxu0 0
    %992 = vmatprep.subr.bf16.mxu0 0
    %993 = vmatpush1.bf16.msra.mxu0 0
    %994 = vmatprep.subr.bf16.mxu0 0
    %995 = vmatpush1.bf16.msra.mxu0 0
    %996 = vmatprep.subr.bf16.mxu0 0
    %997 = vmatpush1.bf16.msra.mxu0 0
    %998 = vmatprep.subr.bf16.mxu0 0
    %999 = vmatpush1.bf16.msra.mxu0 0
    %1000 = vmatprep.mubr.bf16.mxu0 0
    %1001 = vmatmul.mubr.bf16.gmra.mrb[0].mxu0 %v906
    %v1002 = vpop.f32.mrb[0].mxu0
    %v1003 = vadd.f32 %v918, %v1002
    %v1004 = vpop.f32.mrb[0].mxu0
    %v1005 = vpop.f32.mrb[0].mxu0
    %v1006 = vadd.f32 %v918, %v1005
    %v1007 = vpop.f32.mrb[0].mxu0
    %1008 = vmatprep.mubr.bf16.mxu0 0
    %1009 = vmatmul.mubr.bf16.gmra.mrb[0].mxu0 %v907
    %v1010 = vpop.f32.mrb[0].mxu0
    %v1011 = vadd.f32 %v918, %v1010
    %v1012 = vpop.f32.mrb[0].mxu0
    %v1013 = vpop.f32.mrb[0].mxu0
    %v1014 = vadd.f32 %v918, %v1013
    %v1015 = vpop.f32.mrb[0].mxu0
    %1016 = vmatprep.mubr.bf16.mxu0 0
    %1017 = vmatmul.mubr.bf16.gmra.mrb[0].mxu0 %v908
    %v1018 = vpop.f32.mrb[0].mxu0
    %v1019 = vadd.f32 %v918, %v1018
    %v1020 = vpop.f32.mrb[0].mxu0
    %v1021 = vpop.f32.mrb[0].mxu0
    %v1022 = vadd.f32 %v918, %v1021
    %v1023 = vpop.f32.mrb[0].mxu0
    %1024 = vmatprep.mubr.bf16.mxu0 0
    %1025 = vmatmul.mubr.bf16.gmra.mrb[0].mxu0 %v909
    %v1026 = vpop.f32.mrb[0].mxu0
    %v1027 = vadd.f32 %v918, %v1026
    %v1028 = vpop.f32.mrb[0].mxu0
    %v1029 = vpop.f32.mrb[0].mxu0
    %v1030 = vadd.f32 %v918, %v1029
    %v1031 = vpop.f32.mrb[0].mxu0
    %1032 = vmatprep.mubr.bf16.mxu0 0
    %1033 = vmatmul.mubr.bf16.gmra.mrb[0].mxu0 %v910
    %v1034 = vpop.f32.mrb[0].mxu0
    %v1035 = vadd.f32 %v918, %v1034
    %v1036 = vpop.f32.mrb[0].mxu0
    %v1037 = vpop.f32.mrb[0].mxu0
    %v1038 = vadd.f32 %v918, %v1037
    %v1039 = vpop.f32.mrb[0].mxu0
    %1040 = vmatprep.mubr.bf16.mxu0 0
    %1041 = vmatmul.mubr.bf16.gmra.mrb[0].mxu0 %v911
    %v1042 = vpop.f32.mrb[0].mxu0
    %v1043 = vadd.f32 %v918, %v1042
    %v1044 = vpop.f32.mrb[0].mxu0
    %v1045 = vpop.f32.mrb[0].mxu0
    %v1046 = vadd.f32 %v918, %v1045
    %v1047 = vpop.f32.mrb[0].mxu0
    %1048 = vmatprep.mubr.bf16.mxu0 0
    %1049 = vmatmul.mubr.bf16.gmra.mrb[0].mxu0 %v912
    %v1050 = vpop.f32.mrb[0].mxu0
    %v1051 = vadd.f32 %v918, %v1050
    %v1052 = vpop.f32.mrb[0].mxu0
    %v1053 = vpop.f32.mrb[0].mxu0
    %v1054 = vadd.f32 %v918, %v1053
    %v1055 = vpop.f32.mrb[0].mxu0
    %1056 = vmatprep.mubr.bf16.mxu0 0
    %1057 = vmatmul.mubr.bf16.gmra.mrb[0].mxu0 %v913
    %v1058 = vpop.f32.mrb[0].mxu0
    %v1059 = vadd.f32 %v918, %v1058
    %v1060 = vpop.f32.mrb[0].mxu0
    %v1061 = vpop.f32.mrb[0].mxu0
    %v1062 = vadd.f32 %v918, %v1061
    %v1063 = vpop.f32.mrb[0].mxu0
    %1064 = vdwg.mxu0
    %v1065 = vmax.f32 %v1003, 0.0
    %v1066 = vmax.f32 %v1006, 0.0
    %v1067 = vmax.f32 %v1011, 0.0
    %v1068 = vmax.f32 %v1014, 0.0
    %v1069 = vmax.f32 %v1019, 0.0
    %v1070 = vmax.f32 %v1022, 0.0
    %v1071 = vmax.f32 %v1027, 0.0
    %v1072 = vmax.f32 %v1030, 0.0
    %v1073 = vmax.f32 %v1035, 0.0
    %v1074 = vmax.f32 %v1038, 0.0
    %v1075 = vmax.f32 %v1043, 0.0
    %v1076 = vmax.f32 %v1046, 0.0
    %v1077 = vmax.f32 %v1051, 0.0
    %v1078 = vmax.f32 %v1054, 0.0
    %v1079 = vmax.f32 %v1059, 0.0
    %v1080 = vmax.f32 %v1062, 0.0
    %v1081 = vpack.c.bf16 %v1066, %v1065
    %v1082 = vpack.c.bf16 %v1068, %v1067
    %v1083 = vpack.c.bf16 %v1070, %v1069
    %v1084 = vpack.c.bf16 %v1072, %v1071
    %v1085 = vpack.c.bf16 %v1074, %v1073
    %v1086 = vpack.c.bf16 %v1076, %v1075
    %v1087 = vpack.c.bf16 %v1078, %v1077
    %v1088 = vpack.c.bf16 %v1080, %v1079
    %v1090 = vlaneseq
    %v1091 = vshrl.u32 %v1090, 7
    %v1092 = vsub.s32 0, %v1091
    %v1093 = vrot.slane %v808, %v1092
    %v1111 = vunpack.c.l.b16 %v792
    %v1112 = vunpack.c.l.b16 %v793
    %v1113 = vunpack.c.l.b16 %v794
    %v1114 = vunpack.c.l.b16 %v795
    %v1115 = vunpack.c.l.b16 %v796
    %v1116 = vunpack.c.l.b16 %v797
    %v1117 = vunpack.c.l.b16 %v798
    %v1118 = vunpack.c.l.b16 %v799
    %v1119 = vunpack.c.l.b16 %v800
    %v1120 = vunpack.c.l.b16 %v801
    %v1121 = vunpack.c.l.b16 %v802
    %v1122 = vunpack.c.l.b16 %v803
    %v1123 = vunpack.c.l.b16 %v804
    %v1124 = vunpack.c.l.b16 %v805
    %v1125 = vunpack.c.l.b16 %v806
    %v1126 = vunpack.c.l.b16 %v807
    %v1127 = vpack.c.b16 %v1112, %v1111
    %v1128 = vpack.c.b16 %v1114, %v1113
    %v1129 = vpack.c.b16 %v1116, %v1115
    %v1130 = vpack.c.b16 %v1118, %v1117
    %v1131 = vpack.c.b16 %v1120, %v1119
    %v1132 = vpack.c.b16 %v1122, %v1121
    %v1133 = vpack.c.b16 %v1124, %v1123
    %v1134 = vpack.c.b16 %v1126, %v1125
    %1143 = vmatprep.subr.bf16.mxu0 0
    %1144 = vmatpush1.bf16.msra.mxu0 %v1127
    %1145 = vmatprep.subr.bf16.mxu0 0
    %1146 = vmatpush1.bf16.msra.mxu0 %v1128
    %1147 = vmatprep.subr.bf16.mxu0 0
    %1148 = vmatpush1.bf16.msra.mxu0 %v1129
    %1149 = vmatprep.subr.bf16.mxu0 0
    %1150 = vmatpush1.bf16.msra.mxu0 %v1130
    %1151 = vmatprep.subr.bf16.mxu0 0
    %1152 = vmatpush1.bf16.msra.mxu0 %v1131
    %1153 = vmatprep.subr.bf16.mxu0 0
    %1154 = vmatpush1.bf16.msra.mxu0 %v1132
    %1155 = vmatprep.subr.bf16.mxu0 0
    %1156 = vmatpush1.bf16.msra.mxu0 %v1133
    %1157 = vmatprep.subr.bf16.mxu0 0
    %1158 = vmatpush1.bf16.msra.mxu0 %v1134
    %1159 = vmatprep.subr.bf16.mxu0 0
    %1160 = vmatpush1.bf16.msra.mxu0 0
    %1161 = vmatprep.subr.bf16.mxu0 0
    %1162 = vmatpush1.bf16.msra.mxu0 0
    %1163 = vmatprep.subr.bf16.mxu0 0
    %1164 = vmatpush1.bf16.msra.mxu0 0
    %1165 = vmatprep.subr.bf16.mxu0 0
    %1166 = vmatpush1.bf16.msra.mxu0 0
    %1167 = vmatprep.subr.bf16.mxu0 0
    %1168 = vmatpush1.bf16.msra.mxu0 0
    %1169 = vmatprep.subr.bf16.mxu0 0
    %1170 = vmatpush1.bf16.msra.mxu0 0
    %1171 = vmatprep.subr.bf16.mxu0 0
    %1172 = vmatpush1.bf16.msra.mxu0 0
    %1173 = vmatprep.subr.bf16.mxu0 0
    %1174 = vmatpush1.bf16.msra.mxu0 0
    %1175 = vmatprep.mubr.bf16.mxu0 0
    %1176 = vmatmul.mubr.bf16.gmra.mrb[0].mxu0 %v1081
    %v1177 = vpop.f32.mrb[0].mxu0
    %v1178 = vadd.f32 %v1093, %v1177
    %v1179 = vpop.f32.mrb[0].mxu0
    %v1180 = vpop.f32.mrb[0].mxu0
    %v1181 = vadd.f32 %v1093, %v1180
    %v1182 = vpop.f32.mrb[0].mxu0
    %1183 = vmatprep.mubr.bf16.mxu0 0
    %1184 = vmatmul.mubr.bf16.gmra.mrb[0].mxu0 %v1082
    %v1185 = vpop.f32.mrb[0].mxu0
    %v1186 = vadd.f32 %v1093, %v1185
    %v1187 = vpop.f32.mrb[0].mxu0
    %v1188 = vpop.f32.mrb[0].mxu0
    %v1189 = vadd.f32 %v1093, %v1188
    %v1190 = vpop.f32.mrb[0].mxu0
    %1191 = vmatprep.mubr.bf16.mxu0 0
    %1192 = vmatmul.mubr.bf16.gmra.mrb[0].mxu0 %v1083
    %v1193 = vpop.f32.mrb[0].mxu0
    %v1194 = vadd.f32 %v1093, %v1193
    %v1195 = vpop.f32.mrb[0].mxu0
    %v1196 = vpop.f32.mrb[0].mxu0
    %v1197 = vadd.f32 %v1093, %v1196
    %v1198 = vpop.f32.mrb[0].mxu0
    %1199 = vmatprep.mubr.bf16.mxu0 0
    %1200 = vmatmul.mubr.bf16.gmra.mrb[0].mxu0 %v1084
    %v1201 = vpop.f32.mrb[0].mxu0
    %v1202 = vadd.f32 %v1093, %v1201
    %v1203 = vpop.f32.mrb[0].mxu0
    %v1204 = vpop.f32.mrb[0].mxu0
    %v1205 = vadd.f32 %v1093, %v1204
    %v1206 = vpop.f32.mrb[0].mxu0
    %1207 = vmatprep.mubr.bf16.mxu0 0
    %1208 = vmatmul.mubr.bf16.gmra.mrb[0].mxu0 %v1085
    %v1209 = vpop.f32.mrb[0].mxu0
    %v1210 = vadd.f32 %v1093, %v1209
    %v1211 = vpop.f32.mrb[0].mxu0
    %v1212 = vpop.f32.mrb[0].mxu0
    %v1213 = vadd.f32 %v1093, %v1212
    %v1214 = vpop.f32.mrb[0].mxu0
    %1215 = vmatprep.mubr.bf16.mxu0 0
    %1216 = vmatmul.mubr.bf16.gmra.mrb[0].mxu0 %v1086
    %v1217 = vpop.f32.mrb[0].mxu0
    %v1218 = vadd.f32 %v1093, %v1217
    %v1219 = vpop.f32.mrb[0].mxu0
    %v1220 = vpop.f32.mrb[0].mxu0
    %v1221 = vadd.f32 %v1093, %v1220
    %v1222 = vpop.f32.mrb[0].mxu0
    %1223 = vmatprep.mubr.bf16.mxu0 0
    %1224 = vmatmul.mubr.bf16.gmra.mrb[0].mxu0 %v1087
    %v1225 = vpop.f32.mrb[0].mxu0
    %v1226 = vadd.f32 %v1093, %v1225
    %v1227 = vpop.f32.mrb[0].mxu0
    %v1228 = vpop.f32.mrb[0].mxu0
    %v1229 = vadd.f32 %v1093, %v1228
    %v1230 = vpop.f32.mrb[0].mxu0
    %1231 = vmatprep.mubr.bf16.mxu0 0
    %1232 = vmatmul.mubr.bf16.gmra.mrb[0].mxu0 %v1088
    %v1233 = vpop.f32.mrb[0].mxu0
    %v1234 = vadd.f32 %v1093, %v1233
    %v1235 = vpop.f32.mrb[0].mxu0
    %v1236 = vpop.f32.mrb[0].mxu0
    %v1237 = vadd.f32 %v1093, %v1236
    %v1238 = vpop.f32.mrb[0].mxu0
    %1239 = vdwg.mxu0
    %v1240 = vmax.f32 %v1178, 0.0
    %v1241 = vmax.f32 %v1181, 0.0
    %v1242 = vmax.f32 %v1186, 0.0
    %v1243 = vmax.f32 %v1189, 0.0
    %v1244 = vmax.f32 %v1194, 0.0
    %v1245 = vmax.f32 %v1197, 0.0
    %v1246 = vmax.f32 %v1202, 0.0
    %v1247 = vmax.f32 %v1205, 0.0
    %v1248 = vmax.f32 %v1210, 0.0
    %v1249 = vmax.f32 %v1213, 0.0
    %v1250 = vmax.f32 %v1218, 0.0
    %v1251 = vmax.f32 %v1221, 0.0
    %v1252 = vmax.f32 %v1226, 0.0
    %v1253 = vmax.f32 %v1229, 0.0
    %v1254 = vmax.f32 %v1234, 0.0
    %v1255 = vmax.f32 %v1237, 0.0
    %v1256 = vpack.c.bf16 %v1241, %v1240
    %v1257 = vpack.c.bf16 %v1243, %v1242
    %v1258 = vpack.c.bf16 %v1245, %v1244
    %v1259 = vpack.c.bf16 %v1247, %v1246
    %v1260 = vpack.c.bf16 %v1249, %v1248
    %v1261 = vpack.c.bf16 %v1251, %v1250
    %v1262 = vpack.c.bf16 %v1253, %v1252
    %v1263 = vpack.c.bf16 %v1255, %v1254
    %v1264 = vld [vmem:[#allocation13] sm:$0xf]
    %v1265 = vld [vmem:[#allocation13 + $0x4] sm:$0xf]
    %v1266 = vld [vmem:[#allocation13 + $0x8] sm:$0xf]
    %v1267 = vld [vmem:[#allocation13 + $0xc] sm:$0xf]
    %v1268 = vld [vmem:[#allocation13 + $0x10] sm:$0xf]
    %v1269 = vld [vmem:[#allocation13 + $0x14] sm:$0xf]
    %v1270 = vld [vmem:[#allocation13 + $0x18] sm:$0xf]
    %v1271 = vld [vmem:[#allocation13 + $0x1c] sm:$0xf]
    %v1272 = vld [vmem:[#allocation13 + $0x20] sm:$0xf]
    %v1273 = vld [vmem:[#allocation13 + $0x24] sm:$0xf]
    %v1274 = vld [vmem:[#allocation13 + $0x28] sm:$0xf]
    %v1275 = vld [vmem:[#allocation13 + $0x2c] sm:$0xf]
    %v1276 = vld [vmem:[#allocation13 + $0x30] sm:$0xf]
    %v1277 = vld [vmem:[#allocation13 + $0x34] sm:$0xf]
    %v1278 = vld [vmem:[#allocation13 + $0x38] sm:$0xf]
    %v1279 = vld [vmem:[#allocation13 + $0x3c] sm:$0xf]
    %v1280 = vld [vmem:[%s11] sm:$0x1]
    %v1281 = vld [vmem:[#allocation14] sm:$0xf]
    %v1282 = vld [vmem:[#allocation14 + $0x4] sm:$0xf]
    %v1283 = vld [vmem:[#allocation14 + $0x8] sm:$0xf]
    %v1284 = vld [vmem:[#allocation14 + $0xc] sm:$0xf]
    %v1285 = vld [vmem:[#allocation14 + $0x10] sm:$0xf]
    %v1286 = vld [vmem:[#allocation14 + $0x14] sm:$0xf]
    %v1287 = vld [vmem:[#allocation14 + $0x18] sm:$0xf]
    %v1288 = vld [vmem:[#allocation14 + $0x1c] sm:$0xf]
    %v1289 = vld [vmem:[#allocation14 + $0x20] sm:$0xf]
    %v1290 = vld [vmem:[#allocation14 + $0x24] sm:$0xf]
    %v1291 = vld [vmem:[#allocation14 + $0x28] sm:$0xf]
    %v1292 = vld [vmem:[#allocation14 + $0x2c] sm:$0xf]
    %v1293 = vld [vmem:[#allocation14 + $0x30] sm:$0xf]
    %v1294 = vld [vmem:[#allocation14 + $0x34] sm:$0xf]
    %v1295 = vld [vmem:[#allocation14 + $0x38] sm:$0xf]
    %v1296 = vld [vmem:[#allocation14 + $0x3c] sm:$0xf]
    %v1297 = vld [vmem:[%s13] sm:$0x1]
    %1298 = vmatprep.subr.bf16.mxu0 0
    %1299 = vmatpush1.bf16.msra.mxu0 %v1256
    %1300 = vmatprep.subr.bf16.mxu0 0
    %1301 = vmatpush1.bf16.msra.mxu0 %v1257
    %1302 = vmatprep.subr.bf16.mxu0 0
    %1303 = vmatpush1.bf16.msra.mxu0 %v1258
    %1304 = vmatprep.subr.bf16.mxu0 0
    %1305 = vmatpush1.bf16.msra.mxu0 %v1259
    %1306 = vmatprep.subr.bf16.mxu0 0
    %1307 = vmatpush1.bf16.msra.mxu0 %v1260
    %1308 = vmatprep.subr.bf16.mxu0 0
    %1309 = vmatpush1.bf16.msra.mxu0 %v1261
    %1310 = vmatprep.subr.bf16.mxu0 0
    %1311 = vmatpush1.bf16.msra.mxu0 %v1262
    %1312 = vmatprep.subr.bf16.mxu0 0
    %1313 = vmatpush1.bf16.msra.mxu0 %v1263
    %1314 = vmatprep.subr.bf16.mxu0 0
    %1315 = vmatpush1.bf16.msra.mxu0 0
    %1316 = vmatprep.subr.bf16.mxu0 0
    %1317 = vmatpush1.bf16.msra.mxu0 0
    %1318 = vmatprep.subr.bf16.mxu0 0
    %1319 = vmatpush1.bf16.msra.mxu0 0
    %1320 = vmatprep.subr.bf16.mxu0 0
    %1321 = vmatpush1.bf16.msra.mxu0 0
    %1322 = vmatprep.subr.bf16.mxu0 0
    %1323 = vmatpush1.bf16.msra.mxu0 0
    %1324 = vmatprep.subr.bf16.mxu0 0
    %1325 = vmatpush1.bf16.msra.mxu0 0
    %1326 = vmatprep.subr.bf16.mxu0 0
    %1327 = vmatpush1.bf16.msra.mxu0 0
    %1328 = vmatprep.subr.bf16.mxu0 0
    %1329 = vmatpush1.bf16.msra.mxu0 0
    %1330 = vmatprep.mubr.bf16.mxu0 0
    %1331 = vmatmul.mubr.bf16.gmra.mrb[0].mxu0 %v256
    %v1332 = vpop.f32.mrb[0].mxu0
    %v1333 = vadd.f32 0.0, %v1332
    %v1334 = vpop.f32.mrb[0].mxu0
    %v1335 = vpop.f32.mrb[0].mxu0
    %v1336 = vadd.f32 0.0, %v1335
    %v1337 = vpop.f32.mrb[0].mxu0
    %1338 = vmatprep.mubr.bf16.mxu0 0
    %1339 = vmatmul.mubr.bf16.gmra.mrb[0].mxu0 %v257
    %v1340 = vpop.f32.mrb[0].mxu0
    %v1341 = vadd.f32 0.0, %v1340
    %v1342 = vpop.f32.mrb[0].mxu0
    %v1343 = vpop.f32.mrb[0].mxu0
    %v1344 = vadd.f32 0.0, %v1343
    %v1345 = vpop.f32.mrb[0].mxu0
    %1346 = vmatprep.mubr.bf16.mxu0 0
    %1347 = vmatmul.mubr.bf16.gmra.mrb[0].mxu0 %v258
    %v1348 = vpop.f32.mrb[0].mxu0
    %v1349 = vadd.f32 0.0, %v1348
    %v1350 = vpop.f32.mrb[0].mxu0
    %v1351 = vpop.f32.mrb[0].mxu0
    %v1352 = vadd.f32 0.0, %v1351
    %v1353 = vpop.f32.mrb[0].mxu0
    %1354 = vmatprep.mubr.bf16.mxu0 0
    %1355 = vmatmul.mubr.bf16.gmra.mrb[0].mxu0 %v259
    %v1356 = vpop.f32.mrb[0].mxu0
    %v1357 = vadd.f32 0.0, %v1356
    %v1358 = vpop.f32.mrb[0].mxu0
    %v1359 = vpop.f32.mrb[0].mxu0
    %v1360 = vadd.f32 0.0, %v1359
    %v1361 = vpop.f32.mrb[0].mxu0
    %1362 = vmatprep.mubr.bf16.mxu0 0
    %1363 = vmatmul.mubr.bf16.gmra.mrb[0].mxu0 %v260
    %v1364 = vpop.f32.mrb[0].mxu0
    %v1365 = vadd.f32 0.0, %v1364
    %v1366 = vpop.f32.mrb[0].mxu0
    %v1367 = vpop.f32.mrb[0].mxu0
    %v1368 = vadd.f32 0.0, %v1367
    %v1369 = vpop.f32.mrb[0].mxu0
    %1370 = vmatprep.mubr.bf16.mxu0 0
    %1371 = vmatmul.mubr.bf16.gmra.mrb[0].mxu0 %v261
    %v1372 = vpop.f32.mrb[0].mxu0
    %v1373 = vadd.f32 0.0, %v1372
    %v1374 = vpop.f32.mrb[0].mxu0
    %v1375 = vpop.f32.mrb[0].mxu0
    %v1376 = vadd.f32 0.0, %v1375
    %v1377 = vpop.f32.mrb[0].mxu0
    %1378 = vmatprep.mubr.bf16.mxu0 0
    %1379 = vmatmul.mubr.bf16.gmra.mrb[0].mxu0 %v262
    %v1380 = vpop.f32.mrb[0].mxu0
    %v1381 = vadd.f32 0.0, %v1380
    %v1382 = vpop.f32.mrb[0].mxu0
    %v1383 = vpop.f32.mrb[0].mxu0
    %v1384 = vadd.f32 0.0, %v1383
    %v1385 = vpop.f32.mrb[0].mxu0
    %1386 = vmatprep.mubr.bf16.mxu0 0
    %1387 = vmatmul.mubr.bf16.gmra.mrb[0].mxu0 %v263
    %v1388 = vpop.f32.mrb[0].mxu0
    %v1389 = vadd.f32 0.0, %v1388
    %v1390 = vpop.f32.mrb[0].mxu0
    %v1391 = vpop.f32.mrb[0].mxu0
    %v1392 = vadd.f32 0.0, %v1391
    %v1393 = vpop.f32.mrb[0].mxu0
    %1394 = vdwg.mxu0
    %v1395 = vpack.c.bf16 %v1336, %v1333
    %v1396 = vpack.c.bf16 %v1344, %v1341
    %v1397 = vpack.c.bf16 %v1352, %v1349
    %v1398 = vpack.c.bf16 %v1360, %v1357
    %v1399 = vpack.c.bf16 %v1368, %v1365
    %v1400 = vpack.c.bf16 %v1376, %v1373
    %v1401 = vpack.c.bf16 %v1384, %v1381
    %v1402 = vpack.c.bf16 %v1392, %v1389
    %v1404 = vlaneseq
    %v1405 = vshrl.u32 %v1404, 7
    %v1406 = vsub.s32 0, %v1405
    %v1407 = vrot.slane %v1280, %v1406
    %v1425 = vunpack.c.l.b16 %v1264
    %v1426 = vunpack.c.l.b16 %v1265
    %v1427 = vunpack.c.l.b16 %v1266
    %v1428 = vunpack.c.l.b16 %v1267
    %v1429 = vunpack.c.l.b16 %v1268
    %v1430 = vunpack.c.l.b16 %v1269
    %v1431 = vunpack.c.l.b16 %v1270
    %v1432 = vunpack.c.l.b16 %v1271
    %v1433 = vunpack.c.l.b16 %v1272
    %v1434 = vunpack.c.l.b16 %v1273
    %v1435 = vunpack.c.l.b16 %v1274
    %v1436 = vunpack.c.l.b16 %v1275
    %v1437 = vunpack.c.l.b16 %v1276
    %v1438 = vunpack.c.l.b16 %v1277
    %v1439 = vunpack.c.l.b16 %v1278
    %v1440 = vunpack.c.l.b16 %v1279
    %v1441 = vpack.c.b16 %v1426, %v1425
    %v1442 = vpack.c.b16 %v1428, %v1427
    %v1443 = vpack.c.b16 %v1430, %v1429
    %v1444 = vpack.c.b16 %v1432, %v1431
    %v1445 = vpack.c.b16 %v1434, %v1433
    %v1446 = vpack.c.b16 %v1436, %v1435
    %v1447 = vpack.c.b16 %v1438, %v1437
    %v1448 = vpack.c.b16 %v1440, %v1439
    %1457 = vmatprep.subr.bf16.mxu0 0
    %1458 = vmatpush1.bf16.msra.mxu0 %v1441
    %1459 = vmatprep.subr.bf16.mxu0 0
    %1460 = vmatpush1.bf16.msra.mxu0 %v1442
    %1461 = vmatprep.subr.bf16.mxu0 0
    %1462 = vmatpush1.bf16.msra.mxu0 %v1443
    %1463 = vmatprep.subr.bf16.mxu0 0
    %1464 = vmatpush1.bf16.msra.mxu0 %v1444
    %1465 = vmatprep.subr.bf16.mxu0 0
    %1466 = vmatpush1.bf16.msra.mxu0 %v1445
    %1467 = vmatprep.subr.bf16.mxu0 0
    %1468 = vmatpush1.bf16.msra.mxu0 %v1446
    %1469 = vmatprep.subr.bf16.mxu0 0
    %1470 = vmatpush1.bf16.msra.mxu0 %v1447
    %1471 = vmatprep.subr.bf16.mxu0 0
    %1472 = vmatpush1.bf16.msra.mxu0 %v1448
    %1473 = vmatprep.subr.bf16.mxu0 0
    %1474 = vmatpush1.bf16.msra.mxu0 0
    %1475 = vmatprep.subr.bf16.mxu0 0
    %1476 = vmatpush1.bf16.msra.mxu0 0
    %1477 = vmatprep.subr.bf16.mxu0 0
    %1478 = vmatpush1.bf16.msra.mxu0 0
    %1479 = vmatprep.subr.bf16.mxu0 0
    %1480 = vmatpush1.bf16.msra.mxu0 0
    %1481 = vmatprep.subr.bf16.mxu0 0
    %1482 = vmatpush1.bf16.msra.mxu0 0
    %1483 = vmatprep.subr.bf16.mxu0 0
    %1484 = vmatpush1.bf16.msra.mxu0 0
    %1485 = vmatprep.subr.bf16.mxu0 0
    %1486 = vmatpush1.bf16.msra.mxu0 0
    %1487 = vmatprep.subr.bf16.mxu0 0
    %1488 = vmatpush1.bf16.msra.mxu0 0
    %1489 = vmatprep.mubr.bf16.mxu0 0
    %1490 = vmatmul.mubr.bf16.gmra.mrb[0].mxu0 %v1395
    %v1491 = vpop.f32.mrb[0].mxu0
    %v1492 = vadd.f32 %v1407, %v1491
    %v1493 = vpop.f32.mrb[0].mxu0
    %v1494 = vpop.f32.mrb[0].mxu0
    %v1495 = vadd.f32 %v1407, %v1494
    %v1496 = vpop.f32.mrb[0].mxu0
    %1497 = vmatprep.mubr.bf16.mxu0 0
    %1498 = vmatmul.mubr.bf16.gmra.mrb[0].mxu0 %v1396
    %v1499 = vpop.f32.mrb[0].mxu0
    %v1500 = vadd.f32 %v1407, %v1499
    %v1501 = vpop.f32.mrb[0].mxu0
    %v1502 = vpop.f32.mrb[0].mxu0
    %v1503 = vadd.f32 %v1407, %v1502
    %v1504 = vpop.f32.mrb[0].mxu0
    %1505 = vmatprep.mubr.bf16.mxu0 0
    %1506 = vmatmul.mubr.bf16.gmra.mrb[0].mxu0 %v1397
    %v1507 = vpop.f32.mrb[0].mxu0
    %v1508 = vadd.f32 %v1407, %v1507
    %v1509 = vpop.f32.mrb[0].mxu0
    %v1510 = vpop.f32.mrb[0].mxu0
    %v1511 = vadd.f32 %v1407, %v1510
    %v1512 = vpop.f32.mrb[0].mxu0
    %1513 = vmatprep.mubr.bf16.mxu0 0
    %1514 = vmatmul.mubr.bf16.gmra.mrb[0].mxu0 %v1398
    %v1515 = vpop.f32.mrb[0].mxu0
    %v1516 = vadd.f32 %v1407, %v1515
    %v1517 = vpop.f32.mrb[0].mxu0
    %v1518 = vpop.f32.mrb[0].mxu0
    %v1519 = vadd.f32 %v1407, %v1518
    %v1520 = vpop.f32.mrb[0].mxu0
    %1521 = vmatprep.mubr.bf16.mxu0 0
    %1522 = vmatmul.mubr.bf16.gmra.mrb[0].mxu0 %v1399
    %v1523 = vpop.f32.mrb[0].mxu0
    %v1524 = vadd.f32 %v1407, %v1523
    %v1525 = vpop.f32.mrb[0].mxu0
    %v1526 = vpop.f32.mrb[0].mxu0
    %v1527 = vadd.f32 %v1407, %v1526
    %v1528 = vpop.f32.mrb[0].mxu0
    %1529 = vmatprep.mubr.bf16.mxu0 0
    %1530 = vmatmul.mubr.bf16.gmra.mrb[0].mxu0 %v1400
    %v1531 = vpop.f32.mrb[0].mxu0
    %v1532 = vadd.f32 %v1407, %v1531
    %v1533 = vpop.f32.mrb[0].mxu0
    %v1534 = vpop.f32.mrb[0].mxu0
    %v1535 = vadd.f32 %v1407, %v1534
    %v1536 = vpop.f32.mrb[0].mxu0
    %1537 = vmatprep.mubr.bf16.mxu0 0
    %1538 = vmatmul.mubr.bf16.gmra.mrb[0].mxu0 %v1401
    %v1539 = vpop.f32.mrb[0].mxu0
    %v1540 = vadd.f32 %v1407, %v1539
    %v1541 = vpop.f32.mrb[0].mxu0
    %v1542 = vpop.f32.mrb[0].mxu0
    %v1543 = vadd.f32 %v1407, %v1542
    %v1544 = vpop.f32.mrb[0].mxu0
    %1545 = vmatprep.mubr.bf16.mxu0 0
    %1546 = vmatmul.mubr.bf16.gmra.mrb[0].mxu0 %v1402
    %v1547 = vpop.f32.mrb[0].mxu0
    %v1548 = vadd.f32 %v1407, %v1547
    %v1549 = vpop.f32.mrb[0].mxu0
    %v1550 = vpop.f32.mrb[0].mxu0
    %v1551 = vadd.f32 %v1407, %v1550
    %v1552 = vpop.f32.mrb[0].mxu0
    %1553 = vdwg.mxu0
    %v1554 = vmax.f32 %v1492, 0.0
    %v1555 = vmax.f32 %v1495, 0.0
    %v1556 = vmax.f32 %v1500, 0.0
    %v1557 = vmax.f32 %v1503, 0.0
    %v1558 = vmax.f32 %v1508, 0.0
    %v1559 = vmax.f32 %v1511, 0.0
    %v1560 = vmax.f32 %v1516, 0.0
    %v1561 = vmax.f32 %v1519, 0.0
    %v1562 = vmax.f32 %v1524, 0.0
    %v1563 = vmax.f32 %v1527, 0.0
    %v1564 = vmax.f32 %v1532, 0.0
    %v1565 = vmax.f32 %v1535, 0.0
    %v1566 = vmax.f32 %v1540, 0.0
    %v1567 = vmax.f32 %v1543, 0.0
    %v1568 = vmax.f32 %v1548, 0.0
    %v1569 = vmax.f32 %v1551, 0.0
    %v1570 = vpack.c.bf16 %v1555, %v1554
    %v1571 = vpack.c.bf16 %v1557, %v1556
    %v1572 = vpack.c.bf16 %v1559, %v1558
    %v1573 = vpack.c.bf16 %v1561, %v1560
    %v1574 = vpack.c.bf16 %v1563, %v1562
    %v1575 = vpack.c.bf16 %v1565, %v1564
    %v1576 = vpack.c.bf16 %v1567, %v1566
    %v1577 = vpack.c.bf16 %v1569, %v1568
    %v1579 = vlaneseq
    %v1580 = vshrl.u32 %v1579, 7
    %v1581 = vsub.s32 0, %v1580
    %v1582 = vrot.slane %v1297, %v1581
    %v1600 = vunpack.c.l.b16 %v1281
    %v1601 = vunpack.c.l.b16 %v1282
    %v1602 = vunpack.c.l.b16 %v1283
    %v1603 = vunpack.c.l.b16 %v1284
    %v1604 = vunpack.c.l.b16 %v1285
    %v1605 = vunpack.c.l.b16 %v1286
    %v1606 = vunpack.c.l.b16 %v1287
    %v1607 = vunpack.c.l.b16 %v1288
    %v1608 = vunpack.c.l.b16 %v1289
    %v1609 = vunpack.c.l.b16 %v1290
    %v1610 = vunpack.c.l.b16 %v1291
    %v1611 = vunpack.c.l.b16 %v1292
    %v1612 = vunpack.c.l.b16 %v1293
    %v1613 = vunpack.c.l.b16 %v1294
    %v1614 = vunpack.c.l.b16 %v1295
    %v1615 = vunpack.c.l.b16 %v1296
    %v1616 = vpack.c.b16 %v1601, %v1600
    %v1617 = vpack.c.b16 %v1603, %v1602
    %v1618 = vpack.c.b16 %v1605, %v1604
    %v1619 = vpack.c.b16 %v1607, %v1606
    %v1620 = vpack.c.b16 %v1609, %v1608
    %v1621 = vpack.c.b16 %v1611, %v1610
    %v1622 = vpack.c.b16 %v1613, %v1612
    %v1623 = vpack.c.b16 %v1615, %v1614
    %1632 = vmatprep.subr.bf16.mxu0 0
    %1633 = vmatpush1.bf16.msra.mxu0 %v1616
    %1634 = vmatprep.subr.bf16.mxu0 0
    %1635 = vmatpush1.bf16.msra.mxu0 %v1617
    %1636 = vmatprep.subr.bf16.mxu0 0
    %1637 = vmatpush1.bf16.msra.mxu0 %v1618
    %1638 = vmatprep.subr.bf16.mxu0 0
    %1639 = vmatpush1.bf16.msra.mxu0 %v1619
    %1640 = vmatprep.subr.bf16.mxu0 0
    %1641 = vmatpush1.bf16.msra.mxu0 %v1620
    %1642 = vmatprep.subr.bf16.mxu0 0
    %1643 = vmatpush1.bf16.msra.mxu0 %v1621
    %1644 = vmatprep.subr.bf16.mxu0 0
    %1645 = vmatpush1.bf16.msra.mxu0 %v1622
    %1646 = vmatprep.subr.bf16.mxu0 0
    %1647 = vmatpush1.bf16.msra.mxu0 %v1623
    %1648 = vmatprep.subr.bf16.mxu0 0
    %1649 = vmatpush1.bf16.msra.mxu0 0
    %1650 = vmatprep.subr.bf16.mxu0 0
    %1651 = vmatpush1.bf16.msra.mxu0 0
    %1652 = vmatprep.subr.bf16.mxu0 0
    %1653 = vmatpush1.bf16.msra.mxu0 0
    %1654 = vmatprep.subr.bf16.mxu0 0
    %1655 = vmatpush1.bf16.msra.mxu0 0
    %1656 = vmatprep.subr.bf16.mxu0 0
    %1657 = vmatpush1.bf16.msra.mxu0 0
    %1658 = vmatprep.subr.bf16.mxu0 0
    %1659 = vmatpush1.bf16.msra.mxu0 0
    %1660 = vmatprep.subr.bf16.mxu0 0
    %1661 = vmatpush1.bf16.msra.mxu0 0
    %1662 = vmatprep.subr.bf16.mxu0 0
    %1663 = vmatpush1.bf16.msra.mxu0 0
    %1664 = vmatprep.mubr.bf16.mxu0 0
    %1665 = vmatmul.mubr.bf16.gmra.mrb[0].mxu0 %v1570
    %v1666 = vpop.f32.mrb[0].mxu0
    %v1667 = vadd.f32 %v1582, %v1666
    %v1668 = vpop.f32.mrb[0].mxu0
    %v1669 = vpop.f32.mrb[0].mxu0
    %v1670 = vadd.f32 %v1582, %v1669
    %v1671 = vpop.f32.mrb[0].mxu0
    %1672 = vmatprep.mubr.bf16.mxu0 0
    %1673 = vmatmul.mubr.bf16.gmra.mrb[0].mxu0 %v1571
    %v1674 = vpop.f32.mrb[0].mxu0
    %v1675 = vadd.f32 %v1582, %v1674
    %v1676 = vpop.f32.mrb[0].mxu0
    %v1677 = vpop.f32.mrb[0].mxu0
    %v1678 = vadd.f32 %v1582, %v1677
    %v1679 = vpop.f32.mrb[0].mxu0
    %1680 = vmatprep.mubr.bf16.mxu0 0
    %1681 = vmatmul.mubr.bf16.gmra.mrb[0].mxu0 %v1572
    %v1682 = vpop.f32.mrb[0].mxu0
    %v1683 = vadd.f32 %v1582, %v1682
    %v1684 = vpop.f32.mrb[0].mxu0
    %v1685 = vpop.f32.mrb[0].mxu0
    %v1686 = vadd.f32 %v1582, %v1685
    %v1687 = vpop.f32.mrb[0].mxu0
    %1688 = vmatprep.mubr.bf16.mxu0 0
    %1689 = vmatmul.mubr.bf16.gmra.mrb[0].mxu0 %v1573
    %v1690 = vpop.f32.mrb[0].mxu0
    %v1691 = vadd.f32 %v1582, %v1690
    %v1692 = vpop.f32.mrb[0].mxu0
    %v1693 = vpop.f32.mrb[0].mxu0
    %v1694 = vadd.f32 %v1582, %v1693
    %v1695 = vpop.f32.mrb[0].mxu0
    %1696 = vmatprep.mubr.bf16.mxu0 0
    %1697 = vmatmul.mubr.bf16.gmra.mrb[0].mxu0 %v1574
    %v1698 = vpop.f32.mrb[0].mxu0
    %v1699 = vadd.f32 %v1582, %v1698
    %v1700 = vpop.f32.mrb[0].mxu0
    %v1701 = vpop.f32.mrb[0].mxu0
    %v1702 = vadd.f32 %v1582, %v1701
    %v1703 = vpop.f32.mrb[0].mxu0
    %1704 = vmatprep.mubr.bf16.mxu0 0
    %1705 = vmatmul.mubr.bf16.gmra.mrb[0].mxu0 %v1575
    %v1706 = vpop.f32.mrb[0].mxu0
    %v1707 = vadd.f32 %v1582, %v1706
    %v1708 = vpop.f32.mrb[0].mxu0
    %v1709 = vpop.f32.mrb[0].mxu0
    %v1710 = vadd.f32 %v1582, %v1709
    %v1711 = vpop.f32.mrb[0].mxu0
    %1712 = vmatprep.mubr.bf16.mxu0 0
    %1713 = vmatmul.mubr.bf16.gmra.mrb[0].mxu0 %v1576
    %v1714 = vpop.f32.mrb[0].mxu0
    %v1715 = vadd.f32 %v1582, %v1714
    %v1716 = vpop.f32.mrb[0].mxu0
    %v1717 = vpop.f32.mrb[0].mxu0
    %v1718 = vadd.f32 %v1582, %v1717
    %v1719 = vpop.f32.mrb[0].mxu0
    %1720 = vmatprep.mubr.bf16.mxu0 0
    %1721 = vmatmul.mubr.bf16.gmra.mrb[0].mxu0 %v1577
    %v1722 = vpop.f32.mrb[0].mxu0
    %v1723 = vadd.f32 %v1582, %v1722
    %v1724 = vpop.f32.mrb[0].mxu0
    %v1725 = vpop.f32.mrb[0].mxu0
    %v1726 = vadd.f32 %v1582, %v1725
    %v1727 = vpop.f32.mrb[0].mxu0
    %1728 = vdwg.mxu0
    %1729 = vst [vmem:[#allocation16] sm:$0xff] %v1667
    %1730 = vst [vmem:[#allocation16 + $0x8] sm:$0xff] %v1670
    %1731 = vst [vmem:[#allocation16 + $0x10] sm:$0xff] %v1675
    %1732 = vst [vmem:[#allocation16 + $0x18] sm:$0xff] %v1678
    %1733 = vst [vmem:[#allocation16 + $0x20] sm:$0xff] %v1683
    %1734 = vst [vmem:[#allocation16 + $0x28] sm:$0xff] %v1686
    %1735 = vst [vmem:[#allocation16 + $0x30] sm:$0xff] %v1691
    %1736 = vst [vmem:[#allocation16 + $0x38] sm:$0xff] %v1694
    %1737 = vst [vmem:[#allocation16 + $0x40] sm:$0xff] %v1699
    %1738 = vst [vmem:[#allocation16 + $0x48] sm:$0xff] %v1702
    %1739 = vst [vmem:[#allocation16 + $0x50] sm:$0xff] %v1707
    %1740 = vst [vmem:[#allocation16 + $0x58] sm:$0xff] %v1710
    %1741 = vst [vmem:[#allocation16 + $0x60] sm:$0xff] %v1715
    %1742 = vst [vmem:[#allocation16 + $0x68] sm:$0xff] %v1718
    %1743 = vst [vmem:[#allocation16 + $0x70] sm:$0xff] %v1723
    %1744 = vst [vmem:[#allocation16 + $0x78] sm:$0xff] %v1726
    // Predicated region
    $region90: #{gin_forward_fused.1} parent=1 // pred_check
      _
    $region91: #{gin_forward_fused.1} parent=1 // pred_check_branch
      %1746 = sbr.rel (0) target = $region93
    $region92: #{gin_forward_fused.1} parent=1 // pred_region
      %s1748 = ssub.s32 2048, 2048
      %1749 = vsyncadd [#allocation4], %s1748
      %s1750 = sshll.u32 [#allocation16], 4
      %s1751 = int_to_ptr.vmem [resolvable:$true] %s1750
      %1756 = dma.vmem_to_hbm [thread:$0]  %s1751, 2048, %s14, [#allocation4], 128, 128, 8
    $region93: #{gin_forward_fused.1} parent=1 // pred_fallthru
      _
    // Predicated region
    $region94: #{gin_forward_fused.1} parent=1 // pred_check
      _
    $region95: #{gin_forward_fused.1} parent=1 // pred_check_branch
      %1758 = sbr.rel (0) target = $region97
    $region96: #{gin_forward_fused.1} parent=1 // pred_region
      %1759 = dma.done [#allocation4], 2048
    $region97: #{gin_forward_fused.1} parent=1 // pred_fallthru
      _
    %1760 = vsyncpa [#allocation3], 1
    %1761 = vsyncpa [#allocation6], 1
    %1762 = vsyncpa [#allocation9], 1
    %1763 = vsyncpa [#allocation12], 1
    %1764 = vsyncpa [#allocation15], 1
    %1765 = vsyncpa [#allocation4], 1

</llo_original>
